<compile_context>
chip_gen: v5e
topology: v5e:2x2
jax: 0.10.0
libtpu: 0.0.40
codegen_flags: <defaults>
</compile_context>

<pallas_src>
import functools

import jax
import jax.numpy as jnp
from jax.experimental import pallas as pl
from jax.experimental.pallas import tpu as pltpu


def _split_heads(x, nh, d, dtype):
    """[S, nh*d] lane-dense slab -> head-batched [nh, S, d] (one stack of static slices)."""
    # At realistic d (>=128-friendly) this would be a plain reshape; at small d every
    # layout pays the same sub-lane cost, so keep the form that lowers robustly.
    return jnp.stack([x[:, h * d:(h + 1) * d] for h in range(nh)], axis=0).astype(dtype)


def mha_kernel(q_ref, k_ref, v_ref, mask_ref,
               wq_ref, wk_ref, wv_ref, wo_ref,
               o_ref, ctx_scr,
               *, head_size, att_size, scale, compute_dtype, exp_dtype):
    """Kernel for one (batch, query-tile) grid step.

    q_ref    : [1, TQ, H]   compute_dtype (bf16)
    k_ref    : [1, Sk, H]   compute_dtype   (resident across the qi axis)
    v_ref    : [1, Sk, H]   compute_dtype   (resident across the qi axis)
    mask_ref : [1, TQ, Sk]  int8 (nonzero == masked out, as in masked_fill_)
    wq/wk/wv : [H, nh*d]    compute_dtype   (pre-transposed: y = x @ W; resident)
    wo       : [nh*d, H]    compute_dtype   (resident)
    o_ref    : [1, TQ, H]   bf16
    ctx_scr  : [TQ, nh*d]   compute_dtype VMEM scratch (head-concat buffer)
    """
    nh, d = head_size, att_size
    cdt = compute_dtype

    q = q_ref[0]            # [TQ, H]
    k = k_ref[0]            # [Sk, H]
    v = v_ref[0]            # [Sk, H]

    # ---- Linear projections: full-width MXU matmuls, f32 accumulation. ----
    # Scale is applied ONCE to the whole projected q (matches q.mul_(self.scale)).
    qp = jnp.dot(q, wq_ref[...], preferred_element_type=jnp.float32) * scale  # [TQ, nh*d]
    kp = jnp.dot(k, wk_ref[...], preferred_element_type=jnp.float32)          # [Sk, nh*d]
    vp = jnp.dot(v, wv_ref[...], preferred_element_type=jnp.float32)          # [Sk, nh*d]

    # ---- Split heads ONCE into head-batched tensors [nh, S, d]. ----
    qh = _split_heads(qp, nh, d, cdt)   # [nh, TQ, d]
    kh = _split_heads(kp, nh, d, cdt)   # [nh, Sk, d]
    vh = _split_heads(vp, nh, d, cdt)   # [nh, Sk, d]

    # ---- Scores for ALL heads in one batched dot_general (contract d). ----
    s = jnp.einsum('hqd,hkd->hqk', qh, kh,
                   preferred_element_type=jnp.float32)        # [nh, TQ, Sk] f32

    # ---- Mask (int8 compared directly, broadcast over heads). ----
    masked = mask_ref[0] != 0                                  # [TQ, Sk] bool
    s = jnp.where(masked[None, :, :], jnp.float32(-1e9), s)

    # ---- Softmax numerator; exp in exp_dtype (bf16 on v6e/v7x), sum in f32. ----
    m = jnp.max(s, axis=-1, keepdims=True)
    e = jnp.exp((s - m).astype(exp_dtype))                     # [nh, TQ, Sk]
    denom = jnp.sum(e.astype(jnp.float32), axis=-1, keepdims=True)  # [nh, TQ, 1] f32

    # ---- Un-normalised P@V for ALL heads (contract Sk), then deferred normalisation. ----
    ctx = jnp.einsum('hqk,hkd->hqd', e.astype(cdt), vh,
                     preferred_element_type=jnp.float32)       # [nh, TQ, d] f32
    ctx = ctx * pl.reciprocal(denom, approx=True)              # O(nh*TQ*d) only

    # ---- Concat heads into natural positions (bf16 scratch), ONE output projection. ----
    for h in range(nh):
        ctx_scr[:, h * d:(h + 1) * d] = ctx[h].astype(cdt)
    out = jnp.dot(ctx_scr[...], wo_ref[...],
                  preferred_element_type=jnp.float32)          # [TQ, H]

    o_ref[0] = out.astype(o_ref.dtype)


def multi_head_attention(q, k, v, mask, wq_t, wk_t, wv_t, wo_t,
                         *, head_size, compute_dtype=jnp.bfloat16,
                         out_dtype=jnp.bfloat16, exp_dtype=jnp.bfloat16,
                         block_q=None):
    """q,k,v: [B, S, H] f32; mask: [B, Sq, Sk] bool (True == masked); w*_t pre-transposed.

    exp_dtype: use jnp.float32 on v5e (no bf16 EUP) or when bitwise-tighter softmax
    is needed; bf16 is the right default on v6e/v7x.
    """
    B, Sq, H = q.shape
    Sk = k.shape[1]
    att_size = H // head_size
    scale = att_size ** (-0.5)

    # Query-tile size: big enough to feed the MXU / amortise per-step overhead, small
    # enough to bound the [nh, TQ, Sk] score slab (halve on v7x's 64 MiB VMEM if needed).
    if block_q is None:
        block_q = min(Sq, 256)
    block_q = min(block_q, Sq)
    num_q_blocks = pl.cdiv(Sq, block_q)

    # bf16 operands for the MXU (accumulation stays f32 inside the kernel),
    # int8 mask to cut its DMA bytes / VMEM footprint 4x vs int32.
    qc, kc, vc = (x.astype(compute_dtype) for x in (q, k, v))
    wqc, wkc, wvc, woc = (w.astype(compute_dtype) for w in (wq_t, wk_t, wv_t, wo_t))
    mask_i8 = mask.astype(jnp.int8)

    kernel = functools.partial(mha_kernel, head_size=head_size,
                               att_size=att_size, scale=scale,
                               compute_dtype=compute_dtype, exp_dtype=exp_dtype)

    return pl.pallas_call(
        kernel,
        out_shape=jax.ShapeDtypeStruct((B, Sq, H), out_dtype),
        grid_spec=pltpu.PrefetchScalarGridSpec(
            num_scalar_prefetch=0,
            grid=(B, num_q_blocks),
            in_specs=[
                pl.BlockSpec((1, block_q, H), lambda b, qi: (b, qi, 0)),
                pl.BlockSpec((1, Sk, H), lambda b, qi: (b, 0, 0)),   # K resident across qi
                pl.BlockSpec((1, Sk, H), lambda b, qi: (b, 0, 0)),   # V resident across qi
                pl.BlockSpec((1, block_q, Sk), lambda b, qi: (b, qi, 0)),
                pl.BlockSpec((H, H), lambda b, qi: (0, 0)),          # weights stay resident
                pl.BlockSpec((H, H), lambda b, qi: (0, 0)),
                pl.BlockSpec((H, H), lambda b, qi: (0, 0)),
                pl.BlockSpec((H, H), lambda b, qi: (0, 0)),
            ],
            out_specs=pl.BlockSpec((1, block_q, H), lambda b, qi: (b, qi, 0)),
            scratch_shapes=[pltpu.VMEM((block_q, H), compute_dtype)],  # bf16 concat buffer
        ),
        compiler_params=pltpu.CompilerParams(
            dimension_semantics=("parallel", "parallel"),   # both axes independent
            vmem_limit_bytes=64 * 1024 * 1024),
    )(qc, kc, vc, mask_i8, wqc, wkc, wvc, woc)


def xavier_uniform(key, out_features, in_features):
    # matches nn.init.xavier_uniform_ for a [out, in] Linear weight
    bound = (6.0 / (in_features + out_features)) ** 0.5
    return jax.random.uniform(key, (out_features, in_features),
                              dtype=jnp.float32, minval=-bound, maxval=bound)


def reference_mha(q, k, v, mask, wq_t, wk_t, wv_t, wo_t, *, head_size):
    B, Sq, H = q.shape
    d = H // head_size
    scale = d ** (-0.5)
    qp = (q @ wq_t).reshape(B, -1, head_size, d).transpose(0, 2, 1, 3) * scale
    kp = (k @ wk_t).reshape(B, -1, head_size, d).transpose(0, 2, 3, 1)
    vp = (v @ wv_t).reshape(B, -1, head_size, d).transpose(0, 2, 1, 3)
    s = qp @ kp
    s = jnp.where(mask[:, None, :, :], -1e9, s)
    p = jax.nn.softmax(s, axis=-1)
    ctx = (p @ vp).transpose(0, 2, 1, 3).reshape(B, -1, head_size * d)
    return ctx @ wo_t


if __name__ == "__main__":
    # Small shapes consistent with the module: hidden=32, head_size=8 -> att_size=4
    B, Sq, Sk, H = 2, 8, 8, 32
    head_size = 8

    key = jax.random.PRNGKey(0)
    kq, kk, kv, kwq, kwk, kwv, kwo, kmask = jax.random.split(key, 8)

    q = jax.random.normal(kq, (B, Sq, H), dtype=jnp.float32)
    k = jax.random.normal(kk, (B, Sk, H), dtype=jnp.float32)
    v = jax.random.normal(kv, (B, Sk, H), dtype=jnp.float32)
    # boolean attention mask: True == masked out (as in masked_fill_)
    mask = jax.random.bernoulli(kmask, p=0.25, shape=(B, Sq, Sk))

    # Linear weights, PyTorch shape [out, in], xavier-uniform; pass transposed.
    wq_t = xavier_uniform(kwq, H, H).T
    wk_t = xavier_uniform(kwk, H, H).T
    wv_t = xavier_uniform(kwv, H, H).T
    wo_t = xavier_uniform(kwo, H, H).T

    out = multi_head_attention(q, k, v, mask, wq_t, wk_t, wv_t, wo_t,
                               head_size=head_size)
    out = jax.block_until_ready(out)

    # f32 reference computed from the same bf16-rounded operands the kernel consumes,
    # so the comparison isolates the kernel's own (bf16 MXU / bf16 exp / approx-reciprocal
    # / bf16 output) error.
    f32 = jnp.float32
    qr, kr, vr = (x.astype(jnp.bfloat16).astype(f32) for x in (q, k, v))
    wqr, wkr, wvr, wor = (w.astype(jnp.bfloat16).astype(f32)
                          for w in (wq_t, wk_t, wv_t, wo_t))
    ref = reference_mha(qr, kr, vr, mask, wqr, wkr, wvr, wor, head_size=head_size)

    assert out.shape == (B, Sq, H)
    out_f32 = out.astype(f32)
    max_err = jnp.max(jnp.abs(out_f32 - ref))
    assert jnp.allclose(out_f32, ref, atol=7.5e-2, rtol=5e-2), f"max err {max_err}"

    print("KERNEL_OK")
</pallas_src>

<mosaic_0001>
module attributes {stable_mosaic.version = 11 : i64} {
  func.func @mha_kernel(%arg0: i32, %arg1: i32, %arg2: memref<1x8x32xbf16, #tpu.memory_space<vmem>>, %arg3: memref<1x8x32xbf16, #tpu.memory_space<vmem>>, %arg4: memref<1x8x32xbf16, #tpu.memory_space<vmem>>, %arg5: memref<1x8x8xi8, #tpu.memory_space<vmem>>, %arg6: memref<32x32xbf16, #tpu.memory_space<vmem>>, %arg7: memref<32x32xbf16, #tpu.memory_space<vmem>>, %arg8: memref<32x32xbf16, #tpu.memory_space<vmem>>, %arg9: memref<32x32xbf16, #tpu.memory_space<vmem>>, %arg10: memref<1x8x32xbf16, #tpu.memory_space<vmem>>, %arg11: memref<8x32xbf16, #tpu.memory_space<vmem>>) attributes {dimension_semantics = [#tpu.dimension_semantics<parallel>, #tpu.dimension_semantics<parallel>], iteration_bounds = array<i64: 2, 1>, scalar_prefetch = 0 : i64, scratch_operands = 1 : i64, tpu.core_type = #tpu.core_type<tc>, window_params = [{transform_indices = @transform_0, window_bounds = array<i64: 1, 8, 32>}, {transform_indices = @transform_1, window_bounds = array<i64: 1, 8, 32>}, {transform_indices = @transform_2, window_bounds = array<i64: 1, 8, 32>}, {transform_indices = @transform_3, window_bounds = array<i64: 1, 8, 8>}, {pipeline_mode = #tpu.pipeline_mode<synchronous>, transform_indices = @transform_4, window_bounds = array<i64: 32, 32>}, {pipeline_mode = #tpu.pipeline_mode<synchronous>, transform_indices = @transform_5, window_bounds = array<i64: 32, 32>}, {pipeline_mode = #tpu.pipeline_mode<synchronous>, transform_indices = @transform_6, window_bounds = array<i64: 32, 32>}, {pipeline_mode = #tpu.pipeline_mode<synchronous>, transform_indices = @transform_7, window_bounds = array<i64: 32, 32>}, {transform_indices = @transform_8, window_bounds = array<i64: 1, 8, 32>}]} {
    %c0 = arith.constant 0 : index
    %c0_0 = arith.constant 0 : index
    %c0_1 = arith.constant 0 : index
    %0 = vector.load %arg2[%c0, %c0_0, %c0_1] : memref<1x8x32xbf16, #tpu.memory_space<vmem>>, vector<1x8x32xbf16>
    %1 = vector.shape_cast %0 : vector<1x8x32xbf16> to vector<8x32xbf16>
    %c0_2 = arith.constant 0 : index
    %c0_3 = arith.constant 0 : index
    %c0_4 = arith.constant 0 : index
    %2 = vector.load %arg3[%c0_2, %c0_3, %c0_4] : memref<1x8x32xbf16, #tpu.memory_space<vmem>>, vector<1x8x32xbf16>
    %3 = vector.shape_cast %2 : vector<1x8x32xbf16> to vector<8x32xbf16>
    %c0_5 = arith.constant 0 : index
    %c0_6 = arith.constant 0 : index
    %c0_7 = arith.constant 0 : index
    %4 = vector.load %arg4[%c0_5, %c0_6, %c0_7] : memref<1x8x32xbf16, #tpu.memory_space<vmem>>, vector<1x8x32xbf16>
    %5 = vector.shape_cast %4 : vector<1x8x32xbf16> to vector<8x32xbf16>
    %c0_8 = arith.constant 0 : index
    %c0_9 = arith.constant 0 : index
    %6 = vector.load %arg6[%c0_8, %c0_9] : memref<32x32xbf16, #tpu.memory_space<vmem>>, vector<32x32xbf16>
    %cst = arith.constant dense<0.000000e+00> : vector<8x32xf32>
    %7 = tpu.matmul %1, %6, %cst {dimension_numbers = #tpu.dot_dimension_numbers<[1], [0], [0], [1], [0, 0, 1, 1], [], []>} : vector<8x32xbf16>, vector<32x32xbf16>, vector<8x32xf32> -> vector<8x32xf32>
    %cst_10 = arith.constant 5.000000e-01 : f32
    %8 = vector.broadcast %cst_10 : f32 to vector<8x32xf32>
    %9 = arith.mulf %7, %8 : vector<8x32xf32>
    %c0_11 = arith.constant 0 : index
    %c0_12 = arith.constant 0 : index
    %10 = vector.load %arg7[%c0_11, %c0_12] : memref<32x32xbf16, #tpu.memory_space<vmem>>, vector<32x32xbf16>
    %cst_13 = arith.constant dense<0.000000e+00> : vector<8x32xf32>
    %11 = tpu.matmul %3, %10, %cst_13 {dimension_numbers = #tpu.dot_dimension_numbers<[1], [0], [0], [1], [0, 0, 1, 1], [], []>} : vector<8x32xbf16>, vector<32x32xbf16>, vector<8x32xf32> -> vector<8x32xf32>
    %c0_14 = arith.constant 0 : index
    %c0_15 = arith.constant 0 : index
    %12 = vector.load %arg8[%c0_14, %c0_15] : memref<32x32xbf16, #tpu.memory_space<vmem>>, vector<32x32xbf16>
    %cst_16 = arith.constant dense<0.000000e+00> : vector<8x32xf32>
    %13 = tpu.matmul %5, %12, %cst_16 {dimension_numbers = #tpu.dot_dimension_numbers<[1], [0], [0], [1], [0, 0, 1, 1], [], []>} : vector<8x32xbf16>, vector<32x32xbf16>, vector<8x32xf32> -> vector<8x32xf32>
    %14 = vector.extract_strided_slice %9 {offsets = [0, 0], sizes = [8, 4], strides = [1, 1]} : vector<8x32xf32> to vector<8x4xf32>
    %15 = vector.extract_strided_slice %9 {offsets = [0, 4], sizes = [8, 4], strides = [1, 1]} : vector<8x32xf32> to vector<8x4xf32>
    %16 = vector.extract_strided_slice %9 {offsets = [0, 8], sizes = [8, 4], strides = [1, 1]} : vector<8x32xf32> to vector<8x4xf32>
    %17 = vector.extract_strided_slice %9 {offsets = [0, 12], sizes = [8, 4], strides = [1, 1]} : vector<8x32xf32> to vector<8x4xf32>
    %18 = vector.extract_strided_slice %9 {offsets = [0, 16], sizes = [8, 4], strides = [1, 1]} : vector<8x32xf32> to vector<8x4xf32>
    %19 = vector.extract_strided_slice %9 {offsets = [0, 20], sizes = [8, 4], strides = [1, 1]} : vector<8x32xf32> to vector<8x4xf32>
    %20 = vector.extract_strided_slice %9 {offsets = [0, 24], sizes = [8, 4], strides = [1, 1]} : vector<8x32xf32> to vector<8x4xf32>
    %21 = vector.extract_strided_slice %9 {offsets = [0, 28], sizes = [8, 4], strides = [1, 1]} : vector<8x32xf32> to vector<8x4xf32>
    %22 = vector.shape_cast %14 : vector<8x4xf32> to vector<1x8x4xf32>
    %23 = vector.shape_cast %15 : vector<8x4xf32> to vector<1x8x4xf32>
    %24 = vector.shape_cast %16 : vector<8x4xf32> to vector<1x8x4xf32>
    %25 = vector.shape_cast %17 : vector<8x4xf32> to vector<1x8x4xf32>
    %26 = vector.shape_cast %18 : vector<8x4xf32> to vector<1x8x4xf32>
    %27 = vector.shape_cast %19 : vector<8x4xf32> to vector<1x8x4xf32>
    %28 = vector.shape_cast %20 : vector<8x4xf32> to vector<1x8x4xf32>
    %29 = vector.shape_cast %21 : vector<8x4xf32> to vector<1x8x4xf32>
    %30 = tpu.concatenate %22, %23, %24, %25, %26, %27, %28, %29 in 0 : vector<1x8x4xf32>, vector<1x8x4xf32>, vector<1x8x4xf32>, vector<1x8x4xf32>, vector<1x8x4xf32>, vector<1x8x4xf32>, vector<1x8x4xf32>, vector<1x8x4xf32> -> vector<8x8x4xf32>
    %31 = arith.truncf %30 : vector<8x8x4xf32> to vector<8x8x4xbf16>
    %32 = vector.extract_strided_slice %11 {offsets = [0, 0], sizes = [8, 4], strides = [1, 1]} : vector<8x32xf32> to vector<8x4xf32>
    %33 = vector.extract_strided_slice %11 {offsets = [0, 4], sizes = [8, 4], strides = [1, 1]} : vector<8x32xf32> to vector<8x4xf32>
    %34 = vector.extract_strided_slice %11 {offsets = [0, 8], sizes = [8, 4], strides = [1, 1]} : vector<8x32xf32> to vector<8x4xf32>
    %35 = vector.extract_strided_slice %11 {offsets = [0, 12], sizes = [8, 4], strides = [1, 1]} : vector<8x32xf32> to vector<8x4xf32>
    %36 = vector.extract_strided_slice %11 {offsets = [0, 16], sizes = [8, 4], strides = [1, 1]} : vector<8x32xf32> to vector<8x4xf32>
    %37 = vector.extract_strided_slice %11 {offsets = [0, 20], sizes = [8, 4], strides = [1, 1]} : vector<8x32xf32> to vector<8x4xf32>
    %38 = vector.extract_strided_slice %11 {offsets = [0, 24], sizes = [8, 4], strides = [1, 1]} : vector<8x32xf32> to vector<8x4xf32>
    %39 = vector.extract_strided_slice %11 {offsets = [0, 28], sizes = [8, 4], strides = [1, 1]} : vector<8x32xf32> to vector<8x4xf32>
    %40 = vector.shape_cast %32 : vector<8x4xf32> to vector<1x8x4xf32>
    %41 = vector.shape_cast %33 : vector<8x4xf32> to vector<1x8x4xf32>
    %42 = vector.shape_cast %34 : vector<8x4xf32> to vector<1x8x4xf32>
    %43 = vector.shape_cast %35 : vector<8x4xf32> to vector<1x8x4xf32>
    %44 = vector.shape_cast %36 : vector<8x4xf32> to vector<1x8x4xf32>
    %45 = vector.shape_cast %37 : vector<8x4xf32> to vector<1x8x4xf32>
    %46 = vector.shape_cast %38 : vector<8x4xf32> to vector<1x8x4xf32>
    %47 = vector.shape_cast %39 : vector<8x4xf32> to vector<1x8x4xf32>
    %48 = tpu.concatenate %40, %41, %42, %43, %44, %45, %46, %47 in 0 : vector<1x8x4xf32>, vector<1x8x4xf32>, vector<1x8x4xf32>, vector<1x8x4xf32>, vector<1x8x4xf32>, vector<1x8x4xf32>, vector<1x8x4xf32>, vector<1x8x4xf32> -> vector<8x8x4xf32>
    %49 = arith.truncf %48 : vector<8x8x4xf32> to vector<8x8x4xbf16>
    %50 = vector.extract_strided_slice %13 {offsets = [0, 0], sizes = [8, 4], strides = [1, 1]} : vector<8x32xf32> to vector<8x4xf32>
    %51 = vector.extract_strided_slice %13 {offsets = [0, 4], sizes = [8, 4], strides = [1, 1]} : vector<8x32xf32> to vector<8x4xf32>
    %52 = vector.extract_strided_slice %13 {offsets = [0, 8], sizes = [8, 4], strides = [1, 1]} : vector<8x32xf32> to vector<8x4xf32>
    %53 = vector.extract_strided_slice %13 {offsets = [0, 12], sizes = [8, 4], strides = [1, 1]} : vector<8x32xf32> to vector<8x4xf32>
    %54 = vector.extract_strided_slice %13 {offsets = [0, 16], sizes = [8, 4], strides = [1, 1]} : vector<8x32xf32> to vector<8x4xf32>
    %55 = vector.extract_strided_slice %13 {offsets = [0, 20], sizes = [8, 4], strides = [1, 1]} : vector<8x32xf32> to vector<8x4xf32>
    %56 = vector.extract_strided_slice %13 {offsets = [0, 24], sizes = [8, 4], strides = [1, 1]} : vector<8x32xf32> to vector<8x4xf32>
    %57 = vector.extract_strided_slice %13 {offsets = [0, 28], sizes = [8, 4], strides = [1, 1]} : vector<8x32xf32> to vector<8x4xf32>
    %58 = vector.shape_cast %50 : vector<8x4xf32> to vector<1x8x4xf32>
    %59 = vector.shape_cast %51 : vector<8x4xf32> to vector<1x8x4xf32>
    %60 = vector.shape_cast %52 : vector<8x4xf32> to vector<1x8x4xf32>
    %61 = vector.shape_cast %53 : vector<8x4xf32> to vector<1x8x4xf32>
    %62 = vector.shape_cast %54 : vector<8x4xf32> to vector<1x8x4xf32>
    %63 = vector.shape_cast %55 : vector<8x4xf32> to vector<1x8x4xf32>
    %64 = vector.shape_cast %56 : vector<8x4xf32> to vector<1x8x4xf32>
    %65 = vector.shape_cast %57 : vector<8x4xf32> to vector<1x8x4xf32>
    %66 = tpu.concatenate %58, %59, %60, %61, %62, %63, %64, %65 in 0 : vector<1x8x4xf32>, vector<1x8x4xf32>, vector<1x8x4xf32>, vector<1x8x4xf32>, vector<1x8x4xf32>, vector<1x8x4xf32>, vector<1x8x4xf32>, vector<1x8x4xf32> -> vector<8x8x4xf32>
    %67 = arith.truncf %66 : vector<8x8x4xf32> to vector<8x8x4xbf16>
    "tpu.trace_start"() <{level = 10 : i32, message = "hqd,hkd->hqk"}> : () -> ()
    %cst_17 = arith.constant dense<0.000000e+00> : vector<8x8x8xf32>
    %68 = tpu.matmul %31, %49, %cst_17 {dimension_numbers = #tpu.dot_dimension_numbers<[2], [2], [1], [1], [0, 0, 0, 1, 1, 1], [0], [0]>} : vector<8x8x4xbf16>, vector<8x8x4xbf16>, vector<8x8x8xf32> -> vector<8x8x8xf32>
    "tpu.trace_stop"() : () -> ()
    %c0_18 = arith.constant 0 : index
    %c0_19 = arith.constant 0 : index
    %c0_20 = arith.constant 0 : index
    %69 = vector.load %arg5[%c0_18, %c0_19, %c0_20] : memref<1x8x8xi8, #tpu.memory_space<vmem>>, vector<1x8x8xi8>
    %70 = vector.shape_cast %69 : vector<1x8x8xi8> to vector<8x8xi8>
    %c0_i8 = arith.constant 0 : i8
    %71 = vector.broadcast %c0_i8 : i8 to vector<8x8xi8>
    %72 = arith.cmpi ne, %70, %71 : vector<8x8xi8>
    %73 = vector.shape_cast %72 : vector<8x8xi1> to vector<1x8x8xi1>
    %cst_21 = arith.constant -1.000000e+09 : f32
    %74 = vector.shape_cast %73 : vector<1x8x8xi1> to vector<1x8x8xi1>
    %75 = vector.broadcast %74 : vector<1x8x8xi1> to vector<8x8x8xi1>
    %76 = vector.broadcast %cst_21 : f32 to vector<8x8x8xf32>
    %77 = arith.select %75, %76, %68 : vector<8x8x8xi1>, vector<8x8x8xf32>
    %cst_22 = arith.constant dense<0xFF800000> : vector<8x8xf32>
    %78 = vector.multi_reduction <maximumf>, %77, %cst_22 [2] : vector<8x8x8xf32> to vector<8x8xf32>
    %79 = vector.shape_cast %78 : vector<8x8xf32> to vector<8x8x1xf32>
    %80 = vector.broadcast %79 : vector<8x8x1xf32> to vector<8x8x8xf32>
    %81 = arith.subf %77, %80 : vector<8x8x8xf32>
    %82 = arith.truncf %81 : vector<8x8x8xf32> to vector<8x8x8xbf16>
    %83 = math.exp %82 : vector<8x8x8xbf16>
    %84 = arith.extf %83 : vector<8x8x8xbf16> to vector<8x8x8xf32>
    %cst_23 = arith.constant dense<0.000000e+00> : vector<8x8xf32>
    %85 = vector.multi_reduction <add>, %84, %cst_23 [2] : vector<8x8x8xf32> to vector<8x8xf32>
    %86 = vector.shape_cast %85 : vector<8x8xf32> to vector<8x8x1xf32>
    "tpu.trace_start"() <{level = 10 : i32, message = "hqk,hkd->hqd"}> : () -> ()
    %cst_24 = arith.constant dense<0.000000e+00> : vector<8x8x4xf32>
    %87 = tpu.matmul %83, %67, %cst_24 {dimension_numbers = #tpu.dot_dimension_numbers<[2], [1], [1], [2], [0, 0, 0, 1, 1, 2], [0], [0]>} : vector<8x8x8xbf16>, vector<8x8x4xbf16>, vector<8x8x4xf32> -> vector<8x8x4xf32>
    "tpu.trace_stop"() : () -> ()
    %88 = tpu.reciprocal %86 {approx = true} : vector<8x8x1xf32> -> vector<8x8x1xf32>
    %89 = vector.broadcast %88 : vector<8x8x1xf32> to vector<8x8x4xf32>
    %90 = arith.mulf %87, %89 : vector<8x8x4xf32>
    %91 = vector.extract_strided_slice %90 {offsets = [0, 0, 0], sizes = [1, 8, 4], strides = [1, 1, 1]} : vector<8x8x4xf32> to vector<1x8x4xf32>
    %92 = vector.shape_cast %91 : vector<1x8x4xf32> to vector<8x4xf32>
    %93 = arith.truncf %92 : vector<8x4xf32> to vector<8x4xbf16>
    %c0_25 = arith.constant 0 : index
    %c0_26 = arith.constant 0 : index
    %94 = vector.load %arg11[%c0_25, %c0_26] : memref<8x32xbf16, #tpu.memory_space<vmem>>, vector<8x4xbf16>
    tpu.vector_store %arg11[%c0_25, %c0_26], %93 {strides = array<i32>} : memref<8x32xbf16, #tpu.memory_space<vmem>>, vector<8x4xbf16>,
    %95 = vector.extract_strided_slice %90 {offsets = [1, 0, 0], sizes = [1, 8, 4], strides = [1, 1, 1]} : vector<8x8x4xf32> to vector<1x8x4xf32>
    %96 = vector.shape_cast %95 : vector<1x8x4xf32> to vector<8x4xf32>
    %97 = arith.truncf %96 : vector<8x4xf32> to vector<8x4xbf16>
    %c0_27 = arith.constant 0 : index
    %c4 = arith.constant 4 : index
    %98 = vector.load %arg11[%c0_27, %c4] : memref<8x32xbf16, #tpu.memory_space<vmem>>, vector<8x4xbf16>
    tpu.vector_store %arg11[%c0_27, %c4], %97 {strides = array<i32>} : memref<8x32xbf16, #tpu.memory_space<vmem>>, vector<8x4xbf16>,
    %99 = vector.extract_strided_slice %90 {offsets = [2, 0, 0], sizes = [1, 8, 4], strides = [1, 1, 1]} : vector<8x8x4xf32> to vector<1x8x4xf32>
    %100 = vector.shape_cast %99 : vector<1x8x4xf32> to vector<8x4xf32>
    %101 = arith.truncf %100 : vector<8x4xf32> to vector<8x4xbf16>
    %c0_28 = arith.constant 0 : index
    %c8 = arith.constant 8 : index
    %102 = vector.load %arg11[%c0_28, %c8] : memref<8x32xbf16, #tpu.memory_space<vmem>>, vector<8x4xbf16>
    tpu.vector_store %arg11[%c0_28, %c8], %101 {strides = array<i32>} : memref<8x32xbf16, #tpu.memory_space<vmem>>, vector<8x4xbf16>,
    %103 = vector.extract_strided_slice %90 {offsets = [3, 0, 0], sizes = [1, 8, 4], strides = [1, 1, 1]} : vector<8x8x4xf32> to vector<1x8x4xf32>
    %104 = vector.shape_cast %103 : vector<1x8x4xf32> to vector<8x4xf32>
    %105 = arith.truncf %104 : vector<8x4xf32> to vector<8x4xbf16>
    %c0_29 = arith.constant 0 : index
    %c12 = arith.constant 12 : index
    %106 = vector.load %arg11[%c0_29, %c12] : memref<8x32xbf16, #tpu.memory_space<vmem>>, vector<8x4xbf16>
    tpu.vector_store %arg11[%c0_29, %c12], %105 {strides = array<i32>} : memref<8x32xbf16, #tpu.memory_space<vmem>>, vector<8x4xbf16>,
    %107 = vector.extract_strided_slice %90 {offsets = [4, 0, 0], sizes = [1, 8, 4], strides = [1, 1, 1]} : vector<8x8x4xf32> to vector<1x8x4xf32>
    %108 = vector.shape_cast %107 : vector<1x8x4xf32> to vector<8x4xf32>
    %109 = arith.truncf %108 : vector<8x4xf32> to vector<8x4xbf16>
    %c0_30 = arith.constant 0 : index
    %c16 = arith.constant 16 : index
    %110 = vector.load %arg11[%c0_30, %c16] : memref<8x32xbf16, #tpu.memory_space<vmem>>, vector<8x4xbf16>
    tpu.vector_store %arg11[%c0_30, %c16], %109 {strides = array<i32>} : memref<8x32xbf16, #tpu.memory_space<vmem>>, vector<8x4xbf16>,
    %111 = vector.extract_strided_slice %90 {offsets = [5, 0, 0], sizes = [1, 8, 4], strides = [1, 1, 1]} : vector<8x8x4xf32> to vector<1x8x4xf32>
    %112 = vector.shape_cast %111 : vector<1x8x4xf32> to vector<8x4xf32>
    %113 = arith.truncf %112 : vector<8x4xf32> to vector<8x4xbf16>
    %c0_31 = arith.constant 0 : index
    %c20 = arith.constant 20 : index
    %114 = vector.load %arg11[%c0_31, %c20] : memref<8x32xbf16, #tpu.memory_space<vmem>>, vector<8x4xbf16>
    tpu.vector_store %arg11[%c0_31, %c20], %113 {strides = array<i32>} : memref<8x32xbf16, #tpu.memory_space<vmem>>, vector<8x4xbf16>,
    %115 = vector.extract_strided_slice %90 {offsets = [6, 0, 0], sizes = [1, 8, 4], strides = [1, 1, 1]} : vector<8x8x4xf32> to vector<1x8x4xf32>
    %116 = vector.shape_cast %115 : vector<1x8x4xf32> to vector<8x4xf32>
    %117 = arith.truncf %116 : vector<8x4xf32> to vector<8x4xbf16>
    %c0_32 = arith.constant 0 : index
    %c24 = arith.constant 24 : index
    %118 = vector.load %arg11[%c0_32, %c24] : memref<8x32xbf16, #tpu.memory_space<vmem>>, vector<8x4xbf16>
    tpu.vector_store %arg11[%c0_32, %c24], %117 {strides = array<i32>} : memref<8x32xbf16, #tpu.memory_space<vmem>>, vector<8x4xbf16>,
    %119 = vector.extract_strided_slice %90 {offsets = [7, 0, 0], sizes = [1, 8, 4], strides = [1, 1, 1]} : vector<8x8x4xf32> to vector<1x8x4xf32>
    %120 = vector.shape_cast %119 : vector<1x8x4xf32> to vector<8x4xf32>
    %121 = arith.truncf %120 : vector<8x4xf32> to vector<8x4xbf16>
    %c0_33 = arith.constant 0 : index
    %c28 = arith.constant 28 : index
    %122 = vector.load %arg11[%c0_33, %c28] : memref<8x32xbf16, #tpu.memory_space<vmem>>, vector<8x4xbf16>
    tpu.vector_store %arg11[%c0_33, %c28], %121 {strides = array<i32>} : memref<8x32xbf16, #tpu.memory_space<vmem>>, vector<8x4xbf16>,
    %c0_34 = arith.constant 0 : index
    %c0_35 = arith.constant 0 : index
    %123 = vector.load %arg11[%c0_34, %c0_35] : memref<8x32xbf16, #tpu.memory_space<vmem>>, vector<8x32xbf16>
    %c0_36 = arith.constant 0 : index
    %c0_37 = arith.constant 0 : index
    %124 = vector.load %arg9[%c0_36, %c0_37] : memref<32x32xbf16, #tpu.memory_space<vmem>>, vector<32x32xbf16>
    %cst_38 = arith.constant dense<0.000000e+00> : vector<8x32xf32>
    %125 = tpu.matmul %123, %124, %cst_38 {dimension_numbers = #tpu.dot_dimension_numbers<[1], [0], [0], [1], [0, 0, 1, 1], [], []>} : vector<8x32xbf16>, vector<32x32xbf16>, vector<8x32xf32> -> vector<8x32xf32>
    %126 = arith.truncf %125 : vector<8x32xf32> to vector<8x32xbf16>
    %c0_39 = arith.constant 0 : index
    %c0_40 = arith.constant 0 : index
    %c0_41 = arith.constant 0 : index
    %127 = vector.load %arg10[%c0_39, %c0_40, %c0_41] : memref<1x8x32xbf16, #tpu.memory_space<vmem>>, vector<1x8x32xbf16>
    %128 = vector.shape_cast %127 : vector<1x8x32xbf16> to vector<8x32xbf16>
    %129 = vector.shape_cast %126 : vector<8x32xbf16> to vector<1x8x32xbf16>
    tpu.vector_store %arg10[%c0_39, %c0_40, %c0_41], %129 {strides = array<i32>} : memref<1x8x32xbf16, #tpu.memory_space<vmem>>, vector<1x8x32xbf16>,
    return
  }
  func.func @transform_0(%arg0: i32, %arg1: i32) -> (i32, i32, i32) {
    %c0_i32 = arith.constant 0 : i32
    %c0_i32_0 = arith.constant 0 : i32
    return %arg0, %arg1, %c0_i32 : i32, i32, i32
  }
  func.func @transform_1(%arg0: i32, %arg1: i32) -> (i32, i32, i32) {
    %c0_i32 = arith.constant 0 : i32
    %c0_i32_0 = arith.constant 0 : i32
    %c0_i32_1 = arith.constant 0 : i32
    return %arg0, %c0_i32, %c0_i32_0 : i32, i32, i32
  }
  func.func @transform_2(%arg0: i32, %arg1: i32) -> (i32, i32, i32) {
    %c0_i32 = arith.constant 0 : i32
    %c0_i32_0 = arith.constant 0 : i32
    %c0_i32_1 = arith.constant 0 : i32
    return %arg0, %c0_i32, %c0_i32_0 : i32, i32, i32
  }
  func.func @transform_3(%arg0: i32, %arg1: i32) -> (i32, i32, i32) {
    %c0_i32 = arith.constant 0 : i32
    %c0_i32_0 = arith.constant 0 : i32
    return %arg0, %arg1, %c0_i32 : i32, i32, i32
  }
  func.func @transform_4(%arg0: i32, %arg1: i32) -> (i32, i32) {
    %c0_i32 = arith.constant 0 : i32
    %c0_i32_0 = arith.constant 0 : i32
    %c0_i32_1 = arith.constant 0 : i32
    return %c0_i32, %c0_i32_0 : i32, i32
  }
  func.func @transform_5(%arg0: i32, %arg1: i32) -> (i32, i32) {
    %c0_i32 = arith.constant 0 : i32
    %c0_i32_0 = arith.constant 0 : i32
    %c0_i32_1 = arith.constant 0 : i32
    return %c0_i32, %c0_i32_0 : i32, i32
  }
  func.func @transform_6(%arg0: i32, %arg1: i32) -> (i32, i32) {
    %c0_i32 = arith.constant 0 : i32
    %c0_i32_0 = arith.constant 0 : i32
    %c0_i32_1 = arith.constant 0 : i32
    return %c0_i32, %c0_i32_0 : i32, i32
  }
  func.func @transform_7(%arg0: i32, %arg1: i32) -> (i32, i32) {
    %c0_i32 = arith.constant 0 : i32
    %c0_i32_0 = arith.constant 0 : i32
    %c0_i32_1 = arith.constant 0 : i32
    return %c0_i32, %c0_i32_0 : i32, i32
  }
  func.func @transform_8(%arg0: i32, %arg1: i32) -> (i32, i32, i32) {
    %c0_i32 = arith.constant 0 : i32
    %c0_i32_0 = arith.constant 0 : i32
    return %arg0, %arg1, %c0_i32 : i32, i32, i32
  }
}

</mosaic_0001>

<llo_original>
// kernel: tpu_custom_call.1
$region0: #{tpu_custom_call.1}
  #allocation0 [shape = 'u32[]', space=smem, size = 0x4, offset = 0x4, fixed_abs, tag = 'smem constant byte address 0x4 - core index']
  #allocation1 [shape = 'u32[72,128]{1,0:T(1,128)}', space=vmem, size = 0x9000, scoped, tag = 'internal scratch']
  #allocation2 [shape = 'bf16[8,32]{1,0:T(8,128)(2,1)}', space=vmem, size = 0x800, scoped, tag = 'scratch operand']
  %s0 = inlined_call_operand.hbm [shape: bf16[2,8,32], index: 0, kind: input, shape index: {}]
  %s1 = inlined_call_operand.hbm [shape: bf16[2,8,32], index: 1, kind: input, shape index: {}]
  %s2 = inlined_call_operand.hbm [shape: bf16[2,8,32], index: 2, kind: input, shape index: {}]
  %s3 = inlined_call_operand.hbm [shape: s8[2,8,8], index: 3, kind: input, shape index: {}]
  %s4 = inlined_call_operand.hbm [shape: bf16[32,32], index: 4, kind: input, shape index: {}]
  %s5 = inlined_call_operand.hbm [shape: bf16[32,32], index: 5, kind: input, shape index: {}]
  %s6 = inlined_call_operand.hbm [shape: bf16[32,32], index: 6, kind: input, shape index: {}]
  %s7 = inlined_call_operand.hbm [shape: bf16[32,32], index: 7, kind: input, shape index: {}]
  %s8 = inlined_call_operand.hbm [shape: bf16[2,8,32], index: 8, kind: output, shape index: {}]
  %s9 = sld [smem:[#allocation0]]
  $region97: #{tpu_custom_call.1} parent=0
    _
  %s11 = ssub.s32 1, %s9
  %s12 = scalar_select 0, %s11, %s9
  $region1: #{tpu_custom_call.1} parent=0
    #allocation3 [shape = 'u8[4096]{0}', space=vmem, size = 0x1000, scoped, tag = 'input window, operand 0']
    #allocation4 [shape = 's32[2]{0}', space=sflag, size = 0x8, scoped, tag = 'scoped memory for tpu_custom_call.1']
    #allocation5 [shape = 's32[2]{0}', space=sflag, size = 0x8, scoped, tag = 'scoped memory for tpu_custom_call.1']
    #allocation6 [shape = 'u8[4096]{0}', space=vmem, size = 0x1000, scoped, tag = 'input window, operand 1']
    #allocation7 [shape = 's32[2]{0}', space=sflag, size = 0x8, scoped, tag = 'scoped memory for tpu_custom_call.1']
    #allocation8 [shape = 'u8[4096]{0}', space=vmem, size = 0x1000, scoped, tag = 'input window, operand 2']
    #allocation9 [shape = 'u8[2048]{0}', space=vmem, size = 0x800, scoped, tag = 'input window, operand 3']
    #allocation10 [shape = 's32[2]{0}', space=sflag, size = 0x8, scoped, tag = 'scoped memory for tpu_custom_call.1']
    #allocation11 [shape = 'u8[8192]{0}', space=vmem, size = 0x2000, scoped, tag = 'input window, operand 4, single buffered']
    #allocation12 [shape = 'u8[8192]{0}', space=vmem, size = 0x2000, scoped, tag = 'input window, operand 5, single buffered']
    #allocation13 [shape = 's32[1]{0}', space=sflag, size = 0x4, scoped, tag = 'scoped memory for tpu_custom_call.1']
    #allocation14 [shape = 'u8[8192]{0}', space=vmem, size = 0x2000, scoped, tag = 'input window, operand 6, single buffered']
    #allocation15 [shape = 'u8[8192]{0}', space=vmem, size = 0x2000, scoped, tag = 'input window, operand 7, single buffered']
    #allocation16 [shape = 's32[1]{0}', space=sflag, size = 0x4, scoped, tag = 'scoped memory for tpu_custom_call.1']
    #allocation17 [shape = 'u8[4096]{0}', space=vmem, size = 0x1000, scoped, tag = 'output window, operand 0']
    %13 = vsyncpa [#allocation4], 0
    %s14 = scalar_lea.sflag [#allocation4], 1
    %15 = vsyncpa %s14, 0
    %16 = vsyncpa [#allocation7], 0
    %s17 = scalar_lea.sflag [#allocation7], 1
    %18 = vsyncpa %s17, 0
    %19 = vsyncpa [#allocation10], 0
    %s20 = scalar_lea.sflag [#allocation10], 1
    %21 = vsyncpa %s20, 0
    %22 = vsyncpa [#allocation13], 0
    %23 = vsyncpa [#allocation16], 0
    %24 = vsyncpa [#allocation5], 0
    %s25 = scalar_lea.sflag [#allocation5], 1
    %26 = vsyncpa %s25, 0
    loop: start=0, step=1, limit=4
    $region2: #{tpu_custom_call.1} parent=1 // loop_pre_header
      _
    $region3: #{tpu_custom_call.1} parent=1 // loop_header
      %s28 = sphi 0, %s32
      %p29 = scmp.ge.s32.totalorder %s28, 4
      %s35 = sphi 0, %s47
      %s36 = sphi 0, %s43
      %s37 = sphi 0, %s35
      %s38 = sphi 0, %s36
      %s39 = sphi 0, %s37
      %s40 = sphi 0, %s38
      %s52 = sphi 0, %s54
      %s55 = sphi 0, %s52
      %s56 = sphi 0, %s55
      %s72 = sphi 0, %s56
      %s78 = sphi 0, %s80
      %s81 = sphi 0, %s78
      %s82 = sphi 0, %s81
      %s98 = sphi 0, %s82
      %s104 = sphi 0, %s106
      %s107 = sphi 0, %s104
      %s108 = sphi 0, %s107
      %s124 = sphi 0, %s108
      %s132 = sphi 0, %s134
      %s135 = sphi 0, %s132
      %s136 = sphi 0, %s135
      %s152 = sphi 0, %s136
      %s156 = sphi 0, %s156
      %s158 = sphi 0, %s156
      %s159 = sphi 0, %s158
      %s173 = sphi 0, %s159
      %s177 = sphi 0, %s177
      %s179 = sphi 0, %s177
      %s180 = sphi 0, %s179
      %s194 = sphi 0, %s180
      %s198 = sphi 0, %s198
      %s200 = sphi 0, %s198
      %s201 = sphi 0, %s200
      %s215 = sphi 0, %s201
      %s219 = sphi 0, %s219
      %s221 = sphi 0, %s219
      %s222 = sphi 0, %s221
      %s236 = sphi 0, %s222
      %s244 = sphi 0, %s246
      %s247 = sphi 0, %s244
      %s248 = sphi 0, %s247
      %s264 = sphi 0, %s248
    $region4: #{tpu_custom_call.1} parent=1 // loop_header_branch
      %31 = sbr.rel (%p29) target = $region8
    $region5: #{tpu_custom_call.1} parent=1 // loop_body
      %s33 = ssub.s32 %s28, 1
      %s34 = ssub.s32 %s28, 2
      %s41 = sadd.s32 1, %s36
      %p42 = scmp.ge.s32.totalorder %s41, 1
      %s43 = scalar_select %p42, 0, %s41
      %s44 = sadd.s32 1, %s35
      %s45 = scalar_select %p42, %s44, %s35
      %p46 = scmp.ge.s32.totalorder %s45, 2
      %s47 = scalar_select %p46, 0, %s45
      %s48 = ssub.s32 %s35, %s47
      %s49 = ssub.s32 %s36, %s43
      %s50 = sor.u32 %s48, %s49
      %p51 = scmp.eq.s32.totalorder %s50, 0
      %s53 = sadd.s32 %s52, 1
      %s54 = scalar_select %p51, %s52, %s53
      %p57 = pneg %p51
      %p58 = scmp.eq.s32.totalorder %s28, 1
      %p59 = por %p57, %p58
      %p60 = scmp.ne.s32.totalorder %s52, %s55
      %p61 = scmp.eq.s32.totalorder %s28, 0
      %p62 = por %p60, %p61
      %p63 = scmp.ne.s32.totalorder %s52, %s55
      %p64 = scmp.eq.s32.totalorder %s33, 1
      %p65 = por %p63, %p64
      %p66 = scmp.ne.s32.totalorder %s55, %s56
      %p67 = scmp.eq.s32.totalorder %s33, 0
      %p68 = por %p66, %p67
      %p69 = scmp.ne.s32.totalorder %s55, %s56
      %p70 = scmp.eq.s32.totalorder %s34, 1
      %p71 = por %p69, %p70
      %p73 = scmp.ne.s32.totalorder %s56, %s72
      %p74 = scmp.eq.s32.totalorder %s34, 0
      %p75 = por %p73, %p74
      %s76 = ssub.s32 %s35, %s47
      %p77 = scmp.eq.s32.totalorder %s76, 0
      %s79 = sadd.s32 %s78, 1
      %s80 = scalar_select %p77, %s78, %s79
      %p83 = pneg %p77
      %p84 = scmp.eq.s32.totalorder %s28, 1
      %p85 = por %p83, %p84
      %p86 = scmp.ne.s32.totalorder %s78, %s81
      %p87 = scmp.eq.s32.totalorder %s28, 0
      %p88 = por %p86, %p87
      %p89 = scmp.ne.s32.totalorder %s78, %s81
      %p90 = scmp.eq.s32.totalorder %s33, 1
      %p91 = por %p89, %p90
      %p92 = scmp.ne.s32.totalorder %s81, %s82
      %p93 = scmp.eq.s32.totalorder %s33, 0
      %p94 = por %p92, %p93
      %p95 = scmp.ne.s32.totalorder %s81, %s82
      %p96 = scmp.eq.s32.totalorder %s34, 1
      %p97 = por %p95, %p96
      %p99 = scmp.ne.s32.totalorder %s82, %s98
      %p100 = scmp.eq.s32.totalorder %s34, 0
      %p101 = por %p99, %p100
      %s102 = ssub.s32 %s35, %s47
      %p103 = scmp.eq.s32.totalorder %s102, 0
      %s105 = sadd.s32 %s104, 1
      %s106 = scalar_select %p103, %s104, %s105
      %p109 = pneg %p103
      %p110 = scmp.eq.s32.totalorder %s28, 1
      %p111 = por %p109, %p110
      %p112 = scmp.ne.s32.totalorder %s104, %s107
      %p113 = scmp.eq.s32.totalorder %s28, 0
      %p114 = por %p112, %p113
      %p115 = scmp.ne.s32.totalorder %s104, %s107
      %p116 = scmp.eq.s32.totalorder %s33, 1
      %p117 = por %p115, %p116
      %p118 = scmp.ne.s32.totalorder %s107, %s108
      %p119 = scmp.eq.s32.totalorder %s33, 0
      %p120 = por %p118, %p119
      %p121 = scmp.ne.s32.totalorder %s107, %s108
      %p122 = scmp.eq.s32.totalorder %s34, 1
      %p123 = por %p121, %p122
      %p125 = scmp.ne.s32.totalorder %s108, %s124
      %p126 = scmp.eq.s32.totalorder %s34, 0
      %p127 = por %p125, %p126
      %s128 = ssub.s32 %s35, %s47
      %s129 = ssub.s32 %s36, %s43
      %s130 = sor.u32 %s128, %s129
      %p131 = scmp.eq.s32.totalorder %s130, 0
      %s133 = sadd.s32 %s132, 1
      %s134 = scalar_select %p131, %s132, %s133
      %p137 = pneg %p131
      %p138 = scmp.eq.s32.totalorder %s28, 1
      %p139 = por %p137, %p138
      %p140 = scmp.ne.s32.totalorder %s132, %s135
      %p141 = scmp.eq.s32.totalorder %s28, 0
      %p142 = por %p140, %p141
      %p143 = scmp.ne.s32.totalorder %s132, %s135
      %p144 = scmp.eq.s32.totalorder %s33, 1
      %p145 = por %p143, %p144
      %p146 = scmp.ne.s32.totalorder %s135, %s136
      %p147 = scmp.eq.s32.totalorder %s33, 0
      %p148 = por %p146, %p147
      %p149 = scmp.ne.s32.totalorder %s135, %s136
      %p150 = scmp.eq.s32.totalorder %s34, 1
      %p151 = por %p149, %p150
      %p153 = scmp.ne.s32.totalorder %s136, %s152
      %p154 = scmp.eq.s32.totalorder %s34, 0
      %p155 = por %p153, %p154
      %s157 = sadd.s32 %s156, 1
      %p160 = scmp.eq.s32.totalorder %s28, 1
      %p161 = scmp.ne.s32.totalorder %s156, %s158
      %p162 = scmp.eq.s32.totalorder %s28, 0
      %p163 = por %p161, %p162
      %p164 = scmp.ne.s32.totalorder %s156, %s158
      %p165 = scmp.eq.s32.totalorder %s33, 1
      %p166 = por %p164, %p165
      %p167 = scmp.ne.s32.totalorder %s158, %s159
      %p168 = scmp.eq.s32.totalorder %s33, 0
      %p169 = por %p167, %p168
      %p170 = scmp.ne.s32.totalorder %s158, %s159
      %p171 = scmp.eq.s32.totalorder %s34, 1
      %p172 = por %p170, %p171
      %p174 = scmp.ne.s32.totalorder %s159, %s173
      %p175 = scmp.eq.s32.totalorder %s34, 0
      %p176 = por %p174, %p175
      %s178 = sadd.s32 %s177, 1
      %p181 = scmp.eq.s32.totalorder %s28, 1
      %p182 = scmp.ne.s32.totalorder %s177, %s179
      %p183 = scmp.eq.s32.totalorder %s28, 0
      %p184 = por %p182, %p183
      %p185 = scmp.ne.s32.totalorder %s177, %s179
      %p186 = scmp.eq.s32.totalorder %s33, 1
      %p187 = por %p185, %p186
      %p188 = scmp.ne.s32.totalorder %s179, %s180
      %p189 = scmp.eq.s32.totalorder %s33, 0
      %p190 = por %p188, %p189
      %p191 = scmp.ne.s32.totalorder %s179, %s180
      %p192 = scmp.eq.s32.totalorder %s34, 1
      %p193 = por %p191, %p192
      %p195 = scmp.ne.s32.totalorder %s180, %s194
      %p196 = scmp.eq.s32.totalorder %s34, 0
      %p197 = por %p195, %p196
      %s199 = sadd.s32 %s198, 1
      %p202 = scmp.eq.s32.totalorder %s28, 1
      %p203 = scmp.ne.s32.totalorder %s198, %s200
      %p204 = scmp.eq.s32.totalorder %s28, 0
      %p205 = por %p203, %p204
      %p206 = scmp.ne.s32.totalorder %s198, %s200
      %p207 = scmp.eq.s32.totalorder %s33, 1
      %p208 = por %p206, %p207
      %p209 = scmp.ne.s32.totalorder %s200, %s201
      %p210 = scmp.eq.s32.totalorder %s33, 0
      %p211 = por %p209, %p210
      %p212 = scmp.ne.s32.totalorder %s200, %s201
      %p213 = scmp.eq.s32.totalorder %s34, 1
      %p214 = por %p212, %p213
      %p216 = scmp.ne.s32.totalorder %s201, %s215
      %p217 = scmp.eq.s32.totalorder %s34, 0
      %p218 = por %p216, %p217
      %s220 = sadd.s32 %s219, 1
      %p223 = scmp.eq.s32.totalorder %s28, 1
      %p224 = scmp.ne.s32.totalorder %s219, %s221
      %p225 = scmp.eq.s32.totalorder %s28, 0
      %p226 = por %p224, %p225
      %p227 = scmp.ne.s32.totalorder %s219, %s221
      %p228 = scmp.eq.s32.totalorder %s33, 1
      %p229 = por %p227, %p228
      %p230 = scmp.ne.s32.totalorder %s221, %s222
      %p231 = scmp.eq.s32.totalorder %s33, 0
      %p232 = por %p230, %p231
      %p233 = scmp.ne.s32.totalorder %s221, %s222
      %p234 = scmp.eq.s32.totalorder %s34, 1
      %p235 = por %p233, %p234
      %p237 = scmp.ne.s32.totalorder %s222, %s236
      %p238 = scmp.eq.s32.totalorder %s34, 0
      %p239 = por %p237, %p238
      %s240 = ssub.s32 %s35, %s47
      %s241 = ssub.s32 %s36, %s43
      %s242 = sor.u32 %s240, %s241
      %p243 = scmp.eq.s32.totalorder %s242, 0
      %s245 = sadd.s32 %s244, 1
      %s246 = scalar_select %p243, %s244, %s245
      %p249 = pneg %p243
      %p250 = scmp.eq.s32.totalorder %s28, 1
      %p251 = por %p249, %p250
      %p252 = scmp.ne.s32.totalorder %s244, %s247
      %p253 = scmp.eq.s32.totalorder %s28, 0
      %p254 = por %p252, %p253
      %p255 = scmp.ne.s32.totalorder %s244, %s247
      %p256 = scmp.eq.s32.totalorder %s33, 1
      %p257 = por %p255, %p256
      %p258 = scmp.ne.s32.totalorder %s247, %s248
      %p259 = scmp.eq.s32.totalorder %s33, 0
      %p260 = por %p258, %p259
      %p261 = scmp.ne.s32.totalorder %s247, %s248
      %p262 = scmp.eq.s32.totalorder %s34, 1
      %p263 = por %p261, %p262
      %p265 = scmp.ne.s32.totalorder %s248, %s264
      %p266 = scmp.eq.s32.totalorder %s34, 0
      %p267 = por %p265, %p266
      %p268 = scmp.le.s32.totalorder 1, %s28
      %p269 = scmp.lt.s32.totalorder %s28, 3
      %p270 = pnand %p268, %p269
      %p271 = pneg %p270
      // Predicated region
      $region9: #{tpu_custom_call.1} parent=5 // pred_check
        _
      $region10: #{tpu_custom_call.1} parent=5 // pred_check_branch
        %273 = sbr.rel (%p270) target = $region12
      $region11: #{tpu_custom_call.1} parent=5 // pred_region
        %s274 = ssub.s32 %s28, 1
        // Predicated region
        $region13: #{tpu_custom_call.1} parent=11 // pred_check
          %p275 = pneg %p169
        $region14: #{tpu_custom_call.1} parent=11 // pred_check_branch
          %277 = sbr.rel (%p275) target = $region16
        $region15: #{tpu_custom_call.1} parent=11 // pred_region
          %279 = vsyncadd [#allocation10], 0
          %s280 = sshll.u32 %s4, 4
          %s281 = int_to_ptr.hbm [resolvable:$true] %s280
          %s282 = sshll.u32 [#allocation11], 4
          %s283 = int_to_ptr.vmem [resolvable:$true] %s282
          %288 = dma.hbm_to_vmem [thread:$0]  %s281, 256, %s283, [#allocation10], 64, 64, 4
        $region16: #{tpu_custom_call.1} parent=11 // pred_fallthru
          _
        // Predicated region
        $region17: #{tpu_custom_call.1} parent=11 // pred_check
          %p289 = pneg %p190
        $region18: #{tpu_custom_call.1} parent=11 // pred_check_branch
          %291 = sbr.rel (%p289) target = $region20
        $region19: #{tpu_custom_call.1} parent=11 // pred_region
          %293 = vsyncadd [#allocation13], 0
          %s294 = sshll.u32 %s5, 4
          %s295 = int_to_ptr.hbm [resolvable:$true] %s294
          %s296 = sshll.u32 [#allocation12], 4
          %s297 = int_to_ptr.vmem [resolvable:$true] %s296
          %302 = dma.hbm_to_vmem [thread:$0]  %s295, 256, %s297, [#allocation13], 64, 64, 4
        $region20: #{tpu_custom_call.1} parent=11 // pred_fallthru
          _
        // Predicated region
        $region21: #{tpu_custom_call.1} parent=11 // pred_check
          %p303 = pneg %p211
        $region22: #{tpu_custom_call.1} parent=11 // pred_check_branch
          %305 = sbr.rel (%p303) target = $region24
        $region23: #{tpu_custom_call.1} parent=11 // pred_region
          %307 = vsyncadd [#allocation13], 0
          %s308 = sshll.u32 %s6, 4
          %s309 = int_to_ptr.hbm [resolvable:$true] %s308
          %s310 = sshll.u32 [#allocation14], 4
          %s311 = int_to_ptr.vmem [resolvable:$true] %s310
          %316 = dma.hbm_to_vmem [thread:$0]  %s309, 256, %s311, [#allocation13], 64, 64, 4
        $region24: #{tpu_custom_call.1} parent=11 // pred_fallthru
          _
        // Predicated region
        $region25: #{tpu_custom_call.1} parent=11 // pred_check
          %p317 = pneg %p232
        $region26: #{tpu_custom_call.1} parent=11 // pred_check_branch
          %319 = sbr.rel (%p317) target = $region28
        $region27: #{tpu_custom_call.1} parent=11 // pred_region
          %321 = vsyncadd [#allocation16], 0
          %s322 = sshll.u32 %s7, 4
          %s323 = int_to_ptr.hbm [resolvable:$true] %s322
          %s324 = sshll.u32 [#allocation15], 4
          %s325 = int_to_ptr.vmem [resolvable:$true] %s324
          %330 = dma.hbm_to_vmem [thread:$0]  %s323, 256, %s325, [#allocation16], 64, 64, 4
        $region28: #{tpu_custom_call.1} parent=11 // pred_fallthru
          _
      $region12: #{tpu_custom_call.1} parent=5 // pred_fallthru
        _
      %p331 = scmp.lt.s32.totalorder %s28, 2
      // Predicated region
      $region29: #{tpu_custom_call.1} parent=5 // pred_check
        %p332 = pneg %p331
      $region30: #{tpu_custom_call.1} parent=5 // pred_check_branch
        %334 = sbr.rel (%p332) target = $region32
      $region31: #{tpu_custom_call.1} parent=5 // pred_region
        // Predicated region
        $region33: #{tpu_custom_call.1} parent=31 // pred_check
          %p335 = pneg %p62
        $region34: #{tpu_custom_call.1} parent=31 // pred_check_branch
          %337 = sbr.rel (%p335) target = $region36
        $region35: #{tpu_custom_call.1} parent=31 // pred_region
          %s338 = sand.u32 %s52, 1
          %s339 = scalar_lea.sflag [#allocation4], %s338
          %s340 = sand.u32 %s52, 1
          %s341 = smul.addr %s340, 4
          %s342 = scalar_lea.vmem [#allocation3], %s341
          %344 = vsyncadd %s339, 0
          %s345 = sadd.s32 %s36, %s35
          %s346 = smul.addr %s345, 4
          %s347 = scalar_lea.hbm %s0, %s346
          %s349 = sshll.u32 %s347, 4
          %s350 = int_to_ptr.hbm [resolvable:$true] %s349
          %s351 = sshll.u32 %s342, 4
          %s352 = int_to_ptr.vmem [resolvable:$true] %s351
          %354 = dma.hbm_to_vmem [thread:$0]  %s350, 64, %s352, %s339
        $region36: #{tpu_custom_call.1} parent=31 // pred_fallthru
          _
        // Predicated region
        $region37: #{tpu_custom_call.1} parent=31 // pred_check
          %p355 = pneg %p88
        $region38: #{tpu_custom_call.1} parent=31 // pred_check_branch
          %357 = sbr.rel (%p355) target = $region40
        $region39: #{tpu_custom_call.1} parent=31 // pred_region
          %s358 = sand.u32 %s28, 1
          %s359 = scalar_lea.sflag [#allocation7], %s358
          %s360 = sand.u32 %s78, 1
          %s361 = smul.addr %s360, 4
          %s362 = scalar_lea.vmem [#allocation6], %s361
          %364 = vsyncadd %s359, 0
          %s365 = smul.addr %s35, 4
          %s366 = scalar_lea.hbm %s1, %s365
          %s368 = sshll.u32 %s366, 4
          %s369 = int_to_ptr.hbm [resolvable:$true] %s368
          %s370 = sshll.u32 %s362, 4
          %s371 = int_to_ptr.vmem [resolvable:$true] %s370
          %373 = dma.hbm_to_vmem [thread:$0]  %s369, 64, %s371, %s359
        $region40: #{tpu_custom_call.1} parent=31 // pred_fallthru
          _
        // Predicated region
        $region41: #{tpu_custom_call.1} parent=31 // pred_check
          %p374 = pneg %p114
        $region42: #{tpu_custom_call.1} parent=31 // pred_check_branch
          %376 = sbr.rel (%p374) target = $region44
        $region43: #{tpu_custom_call.1} parent=31 // pred_region
          %s377 = sand.u32 %s28, 1
          %s378 = scalar_lea.sflag [#allocation7], %s377
          %s379 = sand.u32 %s104, 1
          %s380 = smul.addr %s379, 4
          %s381 = scalar_lea.vmem [#allocation8], %s380
          %383 = vsyncadd %s378, 0
          %s384 = smul.addr %s35, 4
          %s385 = scalar_lea.hbm %s2, %s384
          %s387 = sshll.u32 %s385, 4
          %s388 = int_to_ptr.hbm [resolvable:$true] %s387
          %s389 = sshll.u32 %s381, 4
          %s390 = int_to_ptr.vmem [resolvable:$true] %s389
          %392 = dma.hbm_to_vmem [thread:$0]  %s388, 64, %s390, %s378
        $region44: #{tpu_custom_call.1} parent=31 // pred_fallthru
          _
        // Predicated region
        $region45: #{tpu_custom_call.1} parent=31 // pred_check
          %p393 = pneg %p142
        $region46: #{tpu_custom_call.1} parent=31 // pred_check_branch
          %395 = sbr.rel (%p393) target = $region48
        $region47: #{tpu_custom_call.1} parent=31 // pred_region
          %s396 = sand.u32 %s28, 1
          %s397 = scalar_lea.sflag [#allocation10], %s396
          %s398 = sand.u32 %s132, 1
          %s399 = smul.addr %s398, 2
          %s400 = scalar_lea.vmem [#allocation9], %s399
          %402 = vsyncadd %s397, 0
          %s403 = sadd.s32 %s36, %s35
          %s404 = smul.addr %s403, 2
          %s405 = scalar_lea.hbm %s3, %s404
          %s407 = sshll.u32 %s405, 4
          %s408 = int_to_ptr.hbm [resolvable:$true] %s407
          %s409 = sshll.u32 %s400, 4
          %s410 = int_to_ptr.vmem [resolvable:$true] %s409
          %412 = dma.hbm_to_vmem [thread:$0]  %s408, 32, %s410, %s397
        $region48: #{tpu_custom_call.1} parent=31 // pred_fallthru
          _
      $region32: #{tpu_custom_call.1} parent=5 // pred_fallthru
        _
      %p413 = scmp.le.s32.totalorder 1, %s28
      %p414 = scmp.lt.s32.totalorder %s28, 3
      %p415 = pnand %p413, %p414
      %p416 = pneg %p415
      // Predicated region
      $region49: #{tpu_custom_call.1} parent=5 // pred_check
        _
      $region50: #{tpu_custom_call.1} parent=5 // pred_check_branch
        %418 = sbr.rel (%p415) target = $region52
      $region51: #{tpu_custom_call.1} parent=5 // pred_region
        %s419 = ssub.s32 %s28, 1
        %s420 = sand.u32 %s55, 1
        %s421 = scalar_lea.sflag [#allocation4], %s420
        %s422 = sand.u32 %s55, 1
        %s423 = smul.addr %s422, 4
        %s424 = scalar_lea.vmem [#allocation3], %s423
        // Predicated region
        $region53: #{tpu_custom_call.1} parent=51 // pred_check
          %p425 = pneg %p68
        $region54: #{tpu_custom_call.1} parent=51 // pred_check_branch
          %427 = sbr.rel (%p425) target = $region56
        $region55: #{tpu_custom_call.1} parent=51 // pred_region
          %429 = dma.done %s421, 64
        $region56: #{tpu_custom_call.1} parent=51 // pred_fallthru
          _
        %s430 = sand.u32 %s33, 1
        %s431 = scalar_lea.sflag [#allocation7], %s430
        %s432 = sand.u32 %s81, 1
        %s433 = smul.addr %s432, 4
        %s434 = scalar_lea.vmem [#allocation6], %s433
        // Predicated region
        $region57: #{tpu_custom_call.1} parent=51 // pred_check
          %p435 = pneg %p94
        $region58: #{tpu_custom_call.1} parent=51 // pred_check_branch
          %437 = sbr.rel (%p435) target = $region60
        $region59: #{tpu_custom_call.1} parent=51 // pred_region
          %439 = dma.done %s431, 64
        $region60: #{tpu_custom_call.1} parent=51 // pred_fallthru
          _
        %s440 = sand.u32 %s33, 1
        %s441 = scalar_lea.sflag [#allocation7], %s440
        %s442 = sand.u32 %s107, 1
        %s443 = smul.addr %s442, 4
        %s444 = scalar_lea.vmem [#allocation8], %s443
        // Predicated region
        $region61: #{tpu_custom_call.1} parent=51 // pred_check
          %p445 = pneg %p120
        $region62: #{tpu_custom_call.1} parent=51 // pred_check_branch
          %447 = sbr.rel (%p445) target = $region64
        $region63: #{tpu_custom_call.1} parent=51 // pred_region
          %449 = dma.done %s441, 64
        $region64: #{tpu_custom_call.1} parent=51 // pred_fallthru
          _
        %s450 = sand.u32 %s33, 1
        %s451 = scalar_lea.sflag [#allocation10], %s450
        %s452 = sand.u32 %s135, 1
        %s453 = smul.addr %s452, 2
        %s454 = scalar_lea.vmem [#allocation9], %s453
        // Predicated region
        $region65: #{tpu_custom_call.1} parent=51 // pred_check
          %p455 = pneg %p148
        $region66: #{tpu_custom_call.1} parent=51 // pred_check_branch
          %457 = sbr.rel (%p455) target = $region68
        $region67: #{tpu_custom_call.1} parent=51 // pred_region
          %459 = dma.done %s451, 32
        $region68: #{tpu_custom_call.1} parent=51 // pred_fallthru
          _
        // Predicated region
        $region69: #{tpu_custom_call.1} parent=51 // pred_check
          %p460 = pneg %p169
        $region70: #{tpu_custom_call.1} parent=51 // pred_check_branch
          %462 = sbr.rel (%p460) target = $region72
        $region71: #{tpu_custom_call.1} parent=51 // pred_region
          %464 = dma.done [#allocation10], 256
        $region72: #{tpu_custom_call.1} parent=51 // pred_fallthru
          _
        // Predicated region
        $region73: #{tpu_custom_call.1} parent=51 // pred_check
          %p465 = pneg %p190
        $region74: #{tpu_custom_call.1} parent=51 // pred_check_branch
          %467 = sbr.rel (%p465) target = $region76
        $region75: #{tpu_custom_call.1} parent=51 // pred_region
          %469 = dma.done [#allocation13], 256
        $region76: #{tpu_custom_call.1} parent=51 // pred_fallthru
          _
        // Predicated region
        $region77: #{tpu_custom_call.1} parent=51 // pred_check
          %p470 = pneg %p211
        $region78: #{tpu_custom_call.1} parent=51 // pred_check_branch
          %472 = sbr.rel (%p470) target = $region80
        $region79: #{tpu_custom_call.1} parent=51 // pred_region
          %474 = dma.done [#allocation13], 256
        $region80: #{tpu_custom_call.1} parent=51 // pred_fallthru
          _
        // Predicated region
        $region81: #{tpu_custom_call.1} parent=51 // pred_check
          %p475 = pneg %p232
        $region82: #{tpu_custom_call.1} parent=51 // pred_check_branch
          %477 = sbr.rel (%p475) target = $region84
        $region83: #{tpu_custom_call.1} parent=51 // pred_region
          %479 = dma.done [#allocation16], 256
        $region84: #{tpu_custom_call.1} parent=51 // pred_fallthru
          _
        %s480 = sand.u32 %s55, 1
        %s481 = scalar_lea.sflag [#allocation4], %s480
        %s482 = sand.u32 %s55, 1
        %s483 = smul.addr %s482, 4
        %s484 = scalar_lea.vmem [#allocation3], %s483
        %p485 = pneg %p68
        %p486 = pneg %p65
        %s487 = sand.u32 %s33, 1
        %s488 = scalar_lea.sflag [#allocation7], %s487
        %s489 = sand.u32 %s81, 1
        %s490 = smul.addr %s489, 4
        %s491 = scalar_lea.vmem [#allocation6], %s490
        %p492 = pneg %p94
        %p493 = pneg %p91
        %s494 = sand.u32 %s33, 1
        %s495 = scalar_lea.sflag [#allocation7], %s494
        %s496 = sand.u32 %s107, 1
        %s497 = smul.addr %s496, 4
        %s498 = scalar_lea.vmem [#allocation8], %s497
        %p499 = pneg %p120
        %p500 = pneg %p117
        %s501 = sand.u32 %s33, 1
        %s502 = scalar_lea.sflag [#allocation10], %s501
        %s503 = sand.u32 %s135, 1
        %s504 = smul.addr %s503, 2
        %s505 = scalar_lea.vmem [#allocation9], %s504
        %p506 = pneg %p148
        %p507 = pneg %p145
        %p508 = pneg %p169
        %p509 = pneg %p166
        %p510 = pneg %p190
        %p511 = pneg %p187
        %p512 = pneg %p211
        %p513 = pneg %p208
        %p514 = pneg %p232
        %p515 = pneg %p229
        %p516 = pneg %p260
        %p517 = pneg %p257
        %s518 = sand.u32 %s247, 1
        %s519 = scalar_lea.sflag [#allocation5], %s518
        %s520 = sand.u32 %s247, 1
        %s521 = smul.addr %s520, 4
        %s522 = scalar_lea.vmem [#allocation17], %s521
        %v526 = vld [vmem:[%s424] sm:$0xf]
        %v527 = vld [vmem:[%s434] sm:$0xf]
        %v528 = vld [vmem:[%s444] sm:$0xf]
        %v529 = vld [vmem:[#allocation11] sm:$0xf]
        %v530 = vld [vmem:[#allocation11 + $0x4] sm:$0xf]
        %v531 = vld [vmem:[#allocation11 + $0x8] sm:$0xf]
        %v532 = vld [vmem:[#allocation11 + $0xc] sm:$0xf]
        %v537 = vunpack.c.l.b16 %v529
        %v538 = vunpack.c.l.b16 %v530
        %v539 = vunpack.c.l.b16 %v531
        %v540 = vunpack.c.l.b16 %v532
        %v541 = vpack.c.b16 %v538, %v537
        %v542 = vpack.c.b16 %v540, %v539
        %vm545 = vcmask 261120
        %v547 = vsel %vm545, %v526, 0
        %549 = vmatpush.bf16.msra.mxu0 0
        %550 = vmatpush.bf16.msra.mxu0 0
        %551 = vmatpush.bf16.msra.mxu0 0
        %552 = vmatpush.bf16.msra.mxu0 0
        %553 = vmatpush.bf16.msra.mxu0 0
        %554 = vmatpush.bf16.msra.mxu0 0
        %555 = vmatpush.bf16.msra.mxu0 %v542
        %556 = vmatpush.bf16.msra.mxu0 %v541
        %557 = vmatmul.bf16.gmra.mxu0 %v547
        %v558 = vpop.f32.mrf.mxu0
        %v559 = vadd.f32 0.0, %v558
        %v560 = vpop.f32.mrf.mxu0
        %561 = vdwg.mxu0
        %v562 = vmul.f32 %v559, 0.5
        %v563 = vld [vmem:[#allocation12] sm:$0xf]
        %v564 = vld [vmem:[#allocation12 + $0x4] sm:$0xf]
        %v565 = vld [vmem:[#allocation12 + $0x8] sm:$0xf]
        %v566 = vld [vmem:[#allocation12 + $0xc] sm:$0xf]
        %v571 = vunpack.c.l.b16 %v563
        %v572 = vunpack.c.l.b16 %v564
        %v573 = vunpack.c.l.b16 %v565
        %v574 = vunpack.c.l.b16 %v566
        %v575 = vpack.c.b16 %v572, %v571
        %v576 = vpack.c.b16 %v574, %v573
        %v580 = vsel %vm545, %v527, 0
        %582 = vmatpush.bf16.msra.mxu0 0
        %583 = vmatpush.bf16.msra.mxu0 0
        %584 = vmatpush.bf16.msra.mxu0 0
        %585 = vmatpush.bf16.msra.mxu0 0
        %586 = vmatpush.bf16.msra.mxu0 0
        %587 = vmatpush.bf16.msra.mxu0 0
        %588 = vmatpush.bf16.msra.mxu0 %v576
        %589 = vmatpush.bf16.msra.mxu0 %v575
        %590 = vmatmul.bf16.gmra.mxu0 %v580
        %v591 = vpop.f32.mrf.mxu0
        %v592 = vadd.f32 0.0, %v591
        %v593 = vpop.f32.mrf.mxu0
        %594 = vdwg.mxu0
        %v595 = vld [vmem:[#allocation14] sm:$0xf]
        %v596 = vld [vmem:[#allocation14 + $0x4] sm:$0xf]
        %v597 = vld [vmem:[#allocation14 + $0x8] sm:$0xf]
        %v598 = vld [vmem:[#allocation14 + $0xc] sm:$0xf]
        %v603 = vunpack.c.l.b16 %v595
        %v604 = vunpack.c.l.b16 %v596
        %v605 = vunpack.c.l.b16 %v597
        %v606 = vunpack.c.l.b16 %v598
        %v607 = vpack.c.b16 %v604, %v603
        %v608 = vpack.c.b16 %v606, %v605
        %v612 = vsel %vm545, %v528, 0
        %614 = vmatpush.bf16.msra.mxu0 0
        %615 = vmatpush.bf16.msra.mxu0 0
        %616 = vmatpush.bf16.msra.mxu0 0
        %617 = vmatpush.bf16.msra.mxu0 0
        %618 = vmatpush.bf16.msra.mxu0 0
        %619 = vmatpush.bf16.msra.mxu0 0
        %620 = vmatpush.bf16.msra.mxu0 %v608
        %621 = vmatpush.bf16.msra.mxu0 %v607
        %622 = vmatmul.bf16.gmra.mxu0 %v612
        %v623 = vpop.f32.mrf.mxu0
        %v624 = vadd.f32 0.0, %v623
        %v625 = vpop.f32.mrf.mxu0
        %626 = vdwg.mxu0
        %628 = vrot.lane.b32.xlu0 %v562, 124
        %v629 = vpop.permute.xlu0 %628
        %631 = vrot.lane.b32.xlu0 %v562, 120
        %v632 = vpop.permute.xlu0 %631
        %634 = vrot.lane.b32.xlu0 %v562, 116
        %v635 = vpop.permute.xlu0 %634
        %637 = vrot.lane.b32.xlu0 %v562, 112
        %v638 = vpop.permute.xlu0 %637
        %640 = vrot.lane.b32.xlu0 %v562, 108
        %v641 = vpop.permute.xlu0 %640
        %643 = vrot.lane.b32.xlu0 %v562, 104
        %v644 = vpop.permute.xlu0 %643
        %646 = vrot.lane.b32.xlu0 %v562, 100
        %v647 = vpop.permute.xlu0 %646
        %v649 = vpack.c.bf16 %v562, %v562
        %v650 = vpack.c.bf16 %v629, %v629
        %v651 = vpack.c.bf16 %v632, %v632
        %v652 = vpack.c.bf16 %v635, %v635
        %v653 = vpack.c.bf16 %v638, %v638
        %v654 = vpack.c.bf16 %v641, %v641
        %v655 = vpack.c.bf16 %v644, %v644
        %v656 = vpack.c.bf16 %v647, %v647
        %658 = vrot.lane.b32.xlu0 %v592, 124
        %v659 = vpop.permute.xlu0 %658
        %661 = vrot.lane.b32.xlu0 %v592, 120
        %v662 = vpop.permute.xlu0 %661
        %664 = vrot.lane.b32.xlu0 %v592, 116
        %v665 = vpop.permute.xlu0 %664
        %667 = vrot.lane.b32.xlu0 %v592, 112
        %v668 = vpop.permute.xlu0 %667
        %670 = vrot.lane.b32.xlu0 %v592, 108
        %v671 = vpop.permute.xlu0 %670
        %673 = vrot.lane.b32.xlu0 %v592, 104
        %v674 = vpop.permute.xlu0 %673
        %676 = vrot.lane.b32.xlu0 %v592, 100
        %v677 = vpop.permute.xlu0 %676
        %v679 = vpack.c.bf16 %v592, %v592
        %v680 = vpack.c.bf16 %v659, %v659
        %v681 = vpack.c.bf16 %v662, %v662
        %v682 = vpack.c.bf16 %v665, %v665
        %v683 = vpack.c.bf16 %v668, %v668
        %v684 = vpack.c.bf16 %v671, %v671
        %v685 = vpack.c.bf16 %v674, %v674
        %v686 = vpack.c.bf16 %v677, %v677
        %688 = vrot.lane.b32.xlu0 %v624, 124
        %v689 = vpop.permute.xlu0 %688
        %691 = vrot.lane.b32.xlu0 %v624, 120
        %v692 = vpop.permute.xlu0 %691
        %694 = vrot.lane.b32.xlu0 %v624, 116
        %v695 = vpop.permute.xlu0 %694
        %697 = vrot.lane.b32.xlu0 %v624, 112
        %v698 = vpop.permute.xlu0 %697
        %700 = vrot.lane.b32.xlu0 %v624, 108
        %v701 = vpop.permute.xlu0 %700
        %703 = vrot.lane.b32.xlu0 %v624, 104
        %v704 = vpop.permute.xlu0 %703
        %706 = vrot.lane.b32.xlu0 %v624, 100
        %v707 = vpop.permute.xlu0 %706
        %v709 = vpack.c.bf16 %v624, %v624
        %v710 = vpack.c.bf16 %v689, %v689
        %v711 = vpack.c.bf16 %v692, %v692
        %v712 = vpack.c.bf16 %v695, %v695
        %v713 = vpack.c.bf16 %v698, %v698
        %v714 = vpack.c.bf16 %v701, %v701
        %v715 = vpack.c.bf16 %v704, %v704
        %v716 = vpack.c.bf16 %v707, %v707
        %vm717 = vcmask 31744
        %v719 = vsel %vm717, %v649, 0
        %v722 = vsel %vm717, %v679, 0
        %724 = vmatpush.bf16.xpose.msra.mxu0 0
        %725 = vmatpush.bf16.xpose.msra.mxu0 0
        %726 = vmatpush.bf16.xpose.msra.mxu0 0
        %727 = vmatpush.bf16.xpose.msra.mxu0 0
        %728 = vmatpush.bf16.xpose.msra.mxu0 0
        %729 = vmatpush.bf16.xpose.msra.mxu0 0
        %730 = vmatpush.bf16.xpose.msra.mxu0 0
        %731 = vmatpush.bf16.xpose.msra.mxu0 %v722
        %732 = vmatmul.bf16.gmra.mxu0 %v719
        %v733 = vpop.f32.mrf.mxu0
        %v734 = vadd.f32 0.0, %v733
        %v735 = vpop.f32.mrf.mxu0
        %736 = vdwg.mxu0
        %v738 = vsel %vm717, %v650, 0
        %v741 = vsel %vm717, %v680, 0
        %743 = vmatpush.bf16.xpose.msra.mxu0 0
        %744 = vmatpush.bf16.xpose.msra.mxu0 0
        %745 = vmatpush.bf16.xpose.msra.mxu0 0
        %746 = vmatpush.bf16.xpose.msra.mxu0 0
        %747 = vmatpush.bf16.xpose.msra.mxu0 0
        %748 = vmatpush.bf16.xpose.msra.mxu0 0
        %749 = vmatpush.bf16.xpose.msra.mxu0 0
        %750 = vmatpush.bf16.xpose.msra.mxu0 %v741
        %751 = vmatmul.bf16.gmra.mxu0 %v738
        %v752 = vpop.f32.mrf.mxu0
        %v753 = vadd.f32 0.0, %v752
        %v754 = vpop.f32.mrf.mxu0
        %755 = vdwg.mxu0
        %v757 = vsel %vm717, %v651, 0
        %v760 = vsel %vm717, %v681, 0
        %762 = vmatpush.bf16.xpose.msra.mxu0 0
        %763 = vmatpush.bf16.xpose.msra.mxu0 0
        %764 = vmatpush.bf16.xpose.msra.mxu0 0
        %765 = vmatpush.bf16.xpose.msra.mxu0 0
        %766 = vmatpush.bf16.xpose.msra.mxu0 0
        %767 = vmatpush.bf16.xpose.msra.mxu0 0
        %768 = vmatpush.bf16.xpose.msra.mxu0 0
        %769 = vmatpush.bf16.xpose.msra.mxu0 %v760
        %770 = vmatmul.bf16.gmra.mxu0 %v757
        %v771 = vpop.f32.mrf.mxu0
        %v772 = vadd.f32 0.0, %v771
        %v773 = vpop.f32.mrf.mxu0
        %774 = vdwg.mxu0
        %v776 = vsel %vm717, %v652, 0
        %v779 = vsel %vm717, %v682, 0
        %781 = vmatpush.bf16.xpose.msra.mxu0 0
        %782 = vmatpush.bf16.xpose.msra.mxu0 0
        %783 = vmatpush.bf16.xpose.msra.mxu0 0
        %784 = vmatpush.bf16.xpose.msra.mxu0 0
        %785 = vmatpush.bf16.xpose.msra.mxu0 0
        %786 = vmatpush.bf16.xpose.msra.mxu0 0
        %787 = vmatpush.bf16.xpose.msra.mxu0 0
        %788 = vmatpush.bf16.xpose.msra.mxu0 %v779
        %789 = vmatmul.bf16.gmra.mxu0 %v776
        %v790 = vpop.f32.mrf.mxu0
        %v791 = vadd.f32 0.0, %v790
        %v792 = vpop.f32.mrf.mxu0
        %793 = vdwg.mxu0
        %v795 = vsel %vm717, %v653, 0
        %v798 = vsel %vm717, %v683, 0
        %800 = vmatpush.bf16.xpose.msra.mxu0 0
        %801 = vmatpush.bf16.xpose.msra.mxu0 0
        %802 = vmatpush.bf16.xpose.msra.mxu0 0
        %803 = vmatpush.bf16.xpose.msra.mxu0 0
        %804 = vmatpush.bf16.xpose.msra.mxu0 0
        %805 = vmatpush.bf16.xpose.msra.mxu0 0
        %806 = vmatpush.bf16.xpose.msra.mxu0 0
        %807 = vmatpush.bf16.xpose.msra.mxu0 %v798
        %808 = vmatmul.bf16.gmra.mxu0 %v795
        %v809 = vpop.f32.mrf.mxu0
        %v810 = vadd.f32 0.0, %v809
        %v811 = vpop.f32.mrf.mxu0
        %812 = vdwg.mxu0
        %v814 = vsel %vm717, %v654, 0
        %v817 = vsel %vm717, %v684, 0
        %819 = vmatpush.bf16.xpose.msra.mxu0 0
        %820 = vmatpush.bf16.xpose.msra.mxu0 0
        %821 = vmatpush.bf16.xpose.msra.mxu0 0
        %822 = vmatpush.bf16.xpose.msra.mxu0 0
        %823 = vmatpush.bf16.xpose.msra.mxu0 0
        %824 = vmatpush.bf16.xpose.msra.mxu0 0
        %825 = vmatpush.bf16.xpose.msra.mxu0 0
        %826 = vmatpush.bf16.xpose.msra.mxu0 %v817
        %827 = vmatmul.bf16.gmra.mxu0 %v814
        %v828 = vpop.f32.mrf.mxu0
        %v829 = vadd.f32 0.0, %v828
        %v830 = vpop.f32.mrf.mxu0
        %831 = vdwg.mxu0
        %v833 = vsel %vm717, %v655, 0
        %v836 = vsel %vm717, %v685, 0
        %838 = vmatpush.bf16.xpose.msra.mxu0 0
        %839 = vmatpush.bf16.xpose.msra.mxu0 0
        %840 = vmatpush.bf16.xpose.msra.mxu0 0
        %841 = vmatpush.bf16.xpose.msra.mxu0 0
        %842 = vmatpush.bf16.xpose.msra.mxu0 0
        %843 = vmatpush.bf16.xpose.msra.mxu0 0
        %844 = vmatpush.bf16.xpose.msra.mxu0 0
        %845 = vmatpush.bf16.xpose.msra.mxu0 %v836
        %846 = vmatmul.bf16.gmra.mxu0 %v833
        %v847 = vpop.f32.mrf.mxu0
        %v848 = vadd.f32 0.0, %v847
        %v849 = vpop.f32.mrf.mxu0
        %850 = vdwg.mxu0
        %v852 = vsel %vm717, %v656, 0
        %v855 = vsel %vm717, %v686, 0
        %857 = vmatpush.bf16.xpose.msra.mxu0 0
        %858 = vmatpush.bf16.xpose.msra.mxu0 0
        %859 = vmatpush.bf16.xpose.msra.mxu0 0
        %860 = vmatpush.bf16.xpose.msra.mxu0 0
        %861 = vmatpush.bf16.xpose.msra.mxu0 0
        %862 = vmatpush.bf16.xpose.msra.mxu0 0
        %863 = vmatpush.bf16.xpose.msra.mxu0 0
        %864 = vmatpush.bf16.xpose.msra.mxu0 %v855
        %865 = vmatmul.bf16.gmra.mxu0 %v852
        %v866 = vpop.f32.mrf.mxu0
        %v867 = vadd.f32 0.0, %v866
        %v868 = vpop.f32.mrf.mxu0
        %869 = vdwg.mxu0
        %v870 = vld [vmem:[%s454] sm:$0x3]
        %vm871 = vnez %v870
        %v872 = vsel %vm871, 16843009, 0
        %v873 = vunpack.c.0.s8 %v872
        %vm874 = vcmp.ne.s32.totalorder %v873, 0
        %v875 = vsel %vm874, 1, 0
        %vm876 = vcmp.eq.s32.totalorder %v875, 1
        %v877 = vsel %vm876, -1e+09, %v734
        %v878 = vsel %vm876, -1e+09, %v753
        %v879 = vsel %vm876, -1e+09, %v772
        %v880 = vsel %vm876, -1e+09, %v791
        %v881 = vsel %vm876, -1e+09, %v810
        %v882 = vsel %vm876, -1e+09, %v829
        %v883 = vsel %vm876, -1e+09, %v848
        %v884 = vsel %vm876, -1e+09, %v867
        %vm885 = vcmask 64512
        %v886 = vsel %vm885, %v877, -inf
        %887 = vmax.xlane.f32.xlu0 %v886
        %v888 = vpop.xlane.xlu0 %887
        %v889 = vsel %vm885, %v878, -inf
        %890 = vmax.xlane.f32.xlu0 %v889
        %v891 = vpop.xlane.xlu0 %890
        %v892 = vsel %vm885, %v879, -inf
        %893 = vmax.xlane.f32.xlu0 %v892
        %v894 = vpop.xlane.xlu0 %893
        %v895 = vsel %vm885, %v880, -inf
        %896 = vmax.xlane.f32.xlu0 %v895
        %v897 = vpop.xlane.xlu0 %896
        %v898 = vsel %vm885, %v881, -inf
        %899 = vmax.xlane.f32.xlu0 %v898
        %v900 = vpop.xlane.xlu0 %899
        %v901 = vsel %vm885, %v882, -inf
        %902 = vmax.xlane.f32.xlu0 %v901
        %v903 = vpop.xlane.xlu0 %902
        %v904 = vsel %vm885, %v883, -inf
        %905 = vmax.xlane.f32.xlu0 %v904
        %v906 = vpop.xlane.xlu0 %905
        %v907 = vsel %vm885, %v884, -inf
        %908 = vmax.xlane.f32.xlu0 %v907
        %v909 = vpop.xlane.xlu0 %908
        %v910 = vsub.f32 %v877, %v888
        %v911 = vsub.f32 %v878, %v891
        %v912 = vsub.f32 %v879, %v894
        %v913 = vsub.f32 %v880, %v897
        %v914 = vsub.f32 %v881, %v900
        %v915 = vsub.f32 %v882, %v903
        %v916 = vsub.f32 %v883, %v906
        %v917 = vsub.f32 %v884, %v909
        %v918 = vpack.c.bf16 %v910, %v910
        %v919 = vpack.c.bf16 %v911, %v911
        %v920 = vpack.c.bf16 %v912, %v912
        %v921 = vpack.c.bf16 %v913, %v913
        %v922 = vpack.c.bf16 %v914, %v914
        %v923 = vpack.c.bf16 %v915, %v915
        %v924 = vpack.c.bf16 %v916, %v916
        %v925 = vpack.c.bf16 %v917, %v917
        %v926 = vunpack.c.l.bf16 %v918
        %v927 = vunpack.c.l.bf16 %v919
        %v928 = vunpack.c.l.bf16 %v920
        %v929 = vunpack.c.l.bf16 %v921
        %v930 = vunpack.c.l.bf16 %v922
        %v931 = vunpack.c.l.bf16 %v923
        %v932 = vunpack.c.l.bf16 %v924
        %v933 = vunpack.c.l.bf16 %v925
        %v934 = vmul.f32 %v926, 1.442695
        %v935 = vpow.pop %v934
        %v936 = vmul.f32 %v927, 1.442695
        %v937 = vpow.pop %v936
        %v938 = vmul.f32 %v928, 1.442695
        %v939 = vpow.pop %v938
        %v940 = vmul.f32 %v929, 1.442695
        %v941 = vpow.pop %v940
        %v942 = vmul.f32 %v930, 1.442695
        %v943 = vpow.pop %v942
        %v944 = vmul.f32 %v931, 1.442695
        %v945 = vpow.pop %v944
        %v946 = vmul.f32 %v932, 1.442695
        %v947 = vpow.pop %v946
        %v948 = vmul.f32 %v933, 1.442695
        %v949 = vpow.pop %v948
        %v950 = vpack.c.bf16 %v935, %v935
        %v951 = vpack.c.bf16 %v937, %v937
        %v952 = vpack.c.bf16 %v939, %v939
        %v953 = vpack.c.bf16 %v941, %v941
        %v954 = vpack.c.bf16 %v943, %v943
        %v955 = vpack.c.bf16 %v945, %v945
        %v956 = vpack.c.bf16 %v947, %v947
        %v957 = vpack.c.bf16 %v949, %v949
        %v958 = vunpack.c.l.bf16 %v950
        %v959 = vunpack.c.l.bf16 %v951
        %v960 = vunpack.c.l.bf16 %v952
        %v961 = vunpack.c.l.bf16 %v953
        %v962 = vunpack.c.l.bf16 %v954
        %v963 = vunpack.c.l.bf16 %v955
        %v964 = vunpack.c.l.bf16 %v956
        %v965 = vunpack.c.l.bf16 %v957
        %v966 = vsel %vm885, %v958, 0.0
        %967 = vadd.xlane.f32.xlu0 %v966
        %v968 = vpop.xlane.xlu0 %967
        %v969 = vsel %vm885, %v959, 0.0
        %970 = vadd.xlane.f32.xlu0 %v969
        %v971 = vpop.xlane.xlu0 %970
        %v972 = vsel %vm885, %v960, 0.0
        %973 = vadd.xlane.f32.xlu0 %v972
        %v974 = vpop.xlane.xlu0 %973
        %v975 = vsel %vm885, %v961, 0.0
        %976 = vadd.xlane.f32.xlu0 %v975
        %v977 = vpop.xlane.xlu0 %976
        %v978 = vsel %vm885, %v962, 0.0
        %979 = vadd.xlane.f32.xlu0 %v978
        %v980 = vpop.xlane.xlu0 %979
        %v981 = vsel %vm885, %v963, 0.0
        %982 = vadd.xlane.f32.xlu0 %v981
        %v983 = vpop.xlane.xlu0 %982
        %v984 = vsel %vm885, %v964, 0.0
        %985 = vadd.xlane.f32.xlu0 %v984
        %v986 = vpop.xlane.xlu0 %985
        %v987 = vsel %vm885, %v965, 0.0
        %988 = vadd.xlane.f32.xlu0 %v987
        %v989 = vpop.xlane.xlu0 %988
        %v991 = vsel %vm885, %v950, 0
        %vm993 = vcmask 1043456
        %v995 = vsel %vm993, %v709, 0
        %997 = vmatpush.bf16.msra.mxu0 0
        %998 = vmatpush.bf16.msra.mxu0 0
        %999 = vmatpush.bf16.msra.mxu0 0
        %1000 = vmatpush.bf16.msra.mxu0 0
        %1001 = vmatpush.bf16.msra.mxu0 0
        %1002 = vmatpush.bf16.msra.mxu0 0
        %1003 = vmatpush.bf16.msra.mxu0 0
        %1004 = vmatpush.bf16.msra.mxu0 %v995
        %1005 = vmatmul.bf16.gmra.mxu0 %v991
        %v1006 = vpop.f32.mrf.mxu0
        %v1007 = vadd.f32 0.0, %v1006
        %v1008 = vpop.f32.mrf.mxu0
        %1009 = vdwg.mxu0
        %v1011 = vsel %vm885, %v951, 0
        %v1014 = vsel %vm993, %v710, 0
        %1016 = vmatpush.bf16.msra.mxu0 0
        %1017 = vmatpush.bf16.msra.mxu0 0
        %1018 = vmatpush.bf16.msra.mxu0 0
        %1019 = vmatpush.bf16.msra.mxu0 0
        %1020 = vmatpush.bf16.msra.mxu0 0
        %1021 = vmatpush.bf16.msra.mxu0 0
        %1022 = vmatpush.bf16.msra.mxu0 0
        %1023 = vmatpush.bf16.msra.mxu0 %v1014
        %1024 = vmatmul.bf16.gmra.mxu0 %v1011
        %v1025 = vpop.f32.mrf.mxu0
        %v1026 = vadd.f32 0.0, %v1025
        %v1027 = vpop.f32.mrf.mxu0
        %1028 = vdwg.mxu0
        %v1030 = vsel %vm885, %v952, 0
        %v1033 = vsel %vm993, %v711, 0
        %1035 = vmatpush.bf16.msra.mxu0 0
        %1036 = vmatpush.bf16.msra.mxu0 0
        %1037 = vmatpush.bf16.msra.mxu0 0
        %1038 = vmatpush.bf16.msra.mxu0 0
        %1039 = vmatpush.bf16.msra.mxu0 0
        %1040 = vmatpush.bf16.msra.mxu0 0
        %1041 = vmatpush.bf16.msra.mxu0 0
        %1042 = vmatpush.bf16.msra.mxu0 %v1033
        %1043 = vmatmul.bf16.gmra.mxu0 %v1030
        %v1044 = vpop.f32.mrf.mxu0
        %v1045 = vadd.f32 0.0, %v1044
        %v1046 = vpop.f32.mrf.mxu0
        %1047 = vdwg.mxu0
        %v1049 = vsel %vm885, %v953, 0
        %v1052 = vsel %vm993, %v712, 0
        %1054 = vmatpush.bf16.msra.mxu0 0
        %1055 = vmatpush.bf16.msra.mxu0 0
        %1056 = vmatpush.bf16.msra.mxu0 0
        %1057 = vmatpush.bf16.msra.mxu0 0
        %1058 = vmatpush.bf16.msra.mxu0 0
        %1059 = vmatpush.bf16.msra.mxu0 0
        %1060 = vmatpush.bf16.msra.mxu0 0
        %1061 = vmatpush.bf16.msra.mxu0 %v1052
        %1062 = vmatmul.bf16.gmra.mxu0 %v1049
        %v1063 = vpop.f32.mrf.mxu0
        %v1064 = vadd.f32 0.0, %v1063
        %v1065 = vpop.f32.mrf.mxu0
        %1066 = vdwg.mxu0
        %v1068 = vsel %vm885, %v954, 0
        %v1071 = vsel %vm993, %v713, 0
        %1073 = vmatpush.bf16.msra.mxu0 0
        %1074 = vmatpush.bf16.msra.mxu0 0
        %1075 = vmatpush.bf16.msra.mxu0 0
        %1076 = vmatpush.bf16.msra.mxu0 0
        %1077 = vmatpush.bf16.msra.mxu0 0
        %1078 = vmatpush.bf16.msra.mxu0 0
        %1079 = vmatpush.bf16.msra.mxu0 0
        %1080 = vmatpush.bf16.msra.mxu0 %v1071
        %1081 = vmatmul.bf16.gmra.mxu0 %v1068
        %v1082 = vpop.f32.mrf.mxu0
        %v1083 = vadd.f32 0.0, %v1082
        %v1084 = vpop.f32.mrf.mxu0
        %1085 = vdwg.mxu0
        %v1087 = vsel %vm885, %v955, 0
        %v1090 = vsel %vm993, %v714, 0
        %1092 = vmatpush.bf16.msra.mxu0 0
        %1093 = vmatpush.bf16.msra.mxu0 0
        %1094 = vmatpush.bf16.msra.mxu0 0
        %1095 = vmatpush.bf16.msra.mxu0 0
        %1096 = vmatpush.bf16.msra.mxu0 0
        %1097 = vmatpush.bf16.msra.mxu0 0
        %1098 = vmatpush.bf16.msra.mxu0 0
        %1099 = vmatpush.bf16.msra.mxu0 %v1090
        %1100 = vmatmul.bf16.gmra.mxu0 %v1087
        %v1101 = vpop.f32.mrf.mxu0
        %v1102 = vadd.f32 0.0, %v1101
        %v1103 = vpop.f32.mrf.mxu0
        %1104 = vdwg.mxu0
        %v1106 = vsel %vm885, %v956, 0
        %v1109 = vsel %vm993, %v715, 0
        %1111 = vmatpush.bf16.msra.mxu0 0
        %1112 = vmatpush.bf16.msra.mxu0 0
        %1113 = vmatpush.bf16.msra.mxu0 0
        %1114 = vmatpush.bf16.msra.mxu0 0
        %1115 = vmatpush.bf16.msra.mxu0 0
        %1116 = vmatpush.bf16.msra.mxu0 0
        %1117 = vmatpush.bf16.msra.mxu0 0
        %1118 = vmatpush.bf16.msra.mxu0 %v1109
        %1119 = vmatmul.bf16.gmra.mxu0 %v1106
        %v1120 = vpop.f32.mrf.mxu0
        %v1121 = vadd.f32 0.0, %v1120
        %v1122 = vpop.f32.mrf.mxu0
        %1123 = vdwg.mxu0
        %v1125 = vsel %vm885, %v957, 0
        %v1128 = vsel %vm993, %v716, 0
        %1130 = vmatpush.bf16.msra.mxu0 0
        %1131 = vmatpush.bf16.msra.mxu0 0
        %1132 = vmatpush.bf16.msra.mxu0 0
        %1133 = vmatpush.bf16.msra.mxu0 0
        %1134 = vmatpush.bf16.msra.mxu0 0
        %1135 = vmatpush.bf16.msra.mxu0 0
        %1136 = vmatpush.bf16.msra.mxu0 0
        %1137 = vmatpush.bf16.msra.mxu0 %v1128
        %1138 = vmatmul.bf16.gmra.mxu0 %v1125
        %v1139 = vpop.f32.mrf.mxu0
        %v1140 = vadd.f32 0.0, %v1139
        %v1141 = vpop.f32.mrf.mxu0
        %1142 = vdwg.mxu0
        %v1143 = vrcp.pop %v968
        %v1144 = vrcp.pop %v971
        %v1145 = vrcp.pop %v974
        %v1146 = vrcp.pop %v977
        %v1147 = vrcp.pop %v980
        %v1148 = vrcp.pop %v983
        %v1149 = vrcp.pop %v986
        %v1150 = vrcp.pop %v989
        %v1151 = vmul.f32 %v1007, %v1143
        %v1152 = vmul.f32 %v1026, %v1144
        %v1153 = vmul.f32 %v1045, %v1145
        %v1154 = vmul.f32 %v1064, %v1146
        %v1155 = vmul.f32 %v1083, %v1147
        %v1156 = vmul.f32 %v1102, %v1148
        %v1157 = vmul.f32 %v1121, %v1149
        %v1158 = vmul.f32 %v1140, %v1150
        %v1159 = vpack.c.bf16 %v1151, %v1151
        %vm1160 = vcmask 27648
        %1161 = vst.msk [vmem:[#allocation2] sm:$0xf] %vm1160, %v1159
        %v1162 = vpack.c.bf16 %v1152, %v1152
        %1164 = vrot.lane.b32.xlu0 %v1162, 4
        %v1165 = vpop.permute.xlu0 %1164
        %vm1167 = vcmask 60448
        %1168 = vst.msk [vmem:[#allocation2] sm:$0xf] %vm1167, %v1165
        %v1169 = vpack.c.bf16 %v1153, %v1153
        %1171 = vrot.lane.b32.xlu0 %v1169, 8
        %v1172 = vpop.permute.xlu0 %1171
        %vm1174 = vcmask 93248
        %1175 = vst.msk [vmem:[#allocation2] sm:$0xf] %vm1174, %v1172
        %v1176 = vpack.c.bf16 %v1154, %v1154
        %1178 = vrot.lane.b32.xlu0 %v1176, 12
        %v1179 = vpop.permute.xlu0 %1178
        %vm1181 = vcmask 126048
        %1182 = vst.msk [vmem:[#allocation2] sm:$0xf] %vm1181, %v1179
        %v1183 = vpack.c.bf16 %v1155, %v1155
        %1185 = vrot.lane.b32.xlu0 %v1183, 16
        %v1186 = vpop.permute.xlu0 %1185
        %vm1188 = vcmask 158848
        %1189 = vst.msk [vmem:[#allocation2] sm:$0xf] %vm1188, %v1186
        %v1190 = vpack.c.bf16 %v1156, %v1156
        %1192 = vrot.lane.b32.xlu0 %v1190, 20
        %v1193 = vpop.permute.xlu0 %1192
        %vm1195 = vcmask 191648
        %1196 = vst.msk [vmem:[#allocation2] sm:$0xf] %vm1195, %v1193
        %v1197 = vpack.c.bf16 %v1157, %v1157
        %1199 = vrot.lane.b32.xlu0 %v1197, 24
        %v1200 = vpop.permute.xlu0 %1199
        %vm1202 = vcmask 224448
        %1203 = vst.msk [vmem:[#allocation2] sm:$0xf] %vm1202, %v1200
        %v1204 = vpack.c.bf16 %v1158, %v1158
        %1206 = vrot.lane.b32.xlu0 %v1204, 28
        %v1207 = vpop.permute.xlu0 %1206
        %vm1209 = vcmask 257248
        %1210 = vst.msk [vmem:[#allocation2] sm:$0xf] %vm1209, %v1207
        %v1211 = vld [vmem:[#allocation2] sm:$0xf]
        %v1212 = vld [vmem:[#allocation15] sm:$0xf]
        %v1213 = vld [vmem:[#allocation15 + $0x4] sm:$0xf]
        %v1214 = vld [vmem:[#allocation15 + $0x8] sm:$0xf]
        %v1215 = vld [vmem:[#allocation15 + $0xc] sm:$0xf]
        %v1220 = vunpack.c.l.b16 %v1212
        %v1221 = vunpack.c.l.b16 %v1213
        %v1222 = vunpack.c.l.b16 %v1214
        %v1223 = vunpack.c.l.b16 %v1215
        %v1224 = vpack.c.b16 %v1221, %v1220
        %v1225 = vpack.c.b16 %v1223, %v1222
        %v1229 = vsel %vm545, %v1211, 0
        %1231 = vmatpush.bf16.msra.mxu0 0
        %1232 = vmatpush.bf16.msra.mxu0 0
        %1233 = vmatpush.bf16.msra.mxu0 0
        %1234 = vmatpush.bf16.msra.mxu0 0
        %1235 = vmatpush.bf16.msra.mxu0 0
        %1236 = vmatpush.bf16.msra.mxu0 0
        %1237 = vmatpush.bf16.msra.mxu0 %v1225
        %1238 = vmatpush.bf16.msra.mxu0 %v1224
        %1239 = vmatmul.bf16.gmra.mxu0 %v1229
        %v1240 = vpop.f32.mrf.mxu0
        %v1241 = vadd.f32 0.0, %v1240
        %v1242 = vpop.f32.mrf.mxu0
        %1243 = vdwg.mxu0
        %v1244 = vpack.c.bf16 %v1241, %v1241
        %vm1245 = vcmask 257024
        %1246 = vst.msk [vmem:[%s522] sm:$0xf] %vm1245, %v1244
        %s1247 = sand.u32 %s247, 1
        %s1248 = scalar_lea.sflag [#allocation5], %s1247
        %s1249 = sand.u32 %s247, 1
        %s1250 = smul.addr %s1249, 4
        %s1251 = scalar_lea.vmem [#allocation17], %s1250
        // Predicated region
        $region85: #{tpu_custom_call.1} parent=51 // pred_check
          %p1252 = pneg %p257
        $region86: #{tpu_custom_call.1} parent=51 // pred_check_branch
          %1254 = sbr.rel (%p1252) target = $region88
        $region87: #{tpu_custom_call.1} parent=51 // pred_region
          %1256 = vsyncadd %s1248, 0
          %s1257 = sadd.s32 %s38, %s37
          %s1258 = smul.addr %s1257, 4
          %s1259 = scalar_lea.hbm %s8, %s1258
          %s1261 = sshll.u32 %s1251, 4
          %s1262 = int_to_ptr.vmem [resolvable:$true] %s1261
          %s1263 = sshll.u32 %s1259, 4
          %s1264 = int_to_ptr.hbm [resolvable:$true] %s1263
          %1266 = dma.vmem_to_hbm [thread:$0]  %s1262, 64, %s1264, %s1248
        $region88: #{tpu_custom_call.1} parent=51 // pred_fallthru
          _
      $region52: #{tpu_custom_call.1} parent=5 // pred_fallthru
        _
      %p1267 = scmp.le.s32.totalorder 2, %s28
      // Predicated region
      $region89: #{tpu_custom_call.1} parent=5 // pred_check
        %p1268 = pneg %p1267
      $region90: #{tpu_custom_call.1} parent=5 // pred_check_branch
        %1270 = sbr.rel (%p1268) target = $region92
      $region91: #{tpu_custom_call.1} parent=5 // pred_region
        %s1271 = ssub.s32 %s28, 2
        // Predicated region
        $region93: #{tpu_custom_call.1} parent=91 // pred_check
          %p1272 = pneg %p263
        $region94: #{tpu_custom_call.1} parent=91 // pred_check_branch
          %1274 = sbr.rel (%p1272) target = $region96
        $region95: #{tpu_custom_call.1} parent=91 // pred_region
          %s1275 = sand.u32 %s248, 1
          %s1276 = scalar_lea.sflag [#allocation5], %s1275
          %s1277 = sand.u32 %s248, 1
          %s1278 = smul.addr %s1277, 4
          %s1279 = scalar_lea.vmem [#allocation17], %s1278
          %1281 = dma.done %s1276, 64
        $region96: #{tpu_custom_call.1} parent=91 // pred_fallthru
          _
      $region92: #{tpu_custom_call.1} parent=5 // pred_fallthru
        _
    $region6: #{tpu_custom_call.1} parent=1 // loop_footer
      %s32 = sadd.s32 1, %s28
    $region7: #{tpu_custom_call.1} parent=1 // loop_footer_branch
      %27 = sbr.rel target = $region3
    $region8: #{tpu_custom_call.1} parent=1 // loop_exit
      _
    %1282 = vsyncpa [#allocation4], 1
    %s1283 = scalar_lea.sflag [#allocation4], 1
    %1284 = vsyncpa %s1283, 1
    %1285 = vsyncpa [#allocation7], 1
    %s1286 = scalar_lea.sflag [#allocation7], 1
    %1287 = vsyncpa %s1286, 1
    %1288 = vsyncpa [#allocation10], 1
    %s1289 = scalar_lea.sflag [#allocation10], 1
    %1290 = vsyncpa %s1289, 1
    %1291 = vsyncpa [#allocation13], 1
    %1292 = vsyncpa [#allocation16], 1
    %1293 = vsyncpa [#allocation5], 1
    %s1294 = scalar_lea.sflag [#allocation5], 1
    %1295 = vsyncpa %s1294, 1

</llo_original>
